<compile_context>
chip_gen: v7x
topology: tpu7x:2x2x1
jax: 0.10.0
libtpu: 0.0.40
codegen_flags: <defaults>
</compile_context>

<pallas_src>
import functools

import jax
import jax.numpy as jnp
from jax import lax
from jax.experimental import pallas as pl
from jax.experimental.pallas import tpu as pltpu

LANE = 128
_VMEM_LIMIT = 32 * 1024 * 1024


def _round_up(x, m):
    return (x + m - 1) // m * m


def _pad2(a, shape):
    return jnp.pad(a, [(0, s - d) for d, s in zip(a.shape, shape)])


# ----------------------------------------------------------------------------
# Full-K GEMM + bias + activation Pallas kernel (no K grid axis, no scratch)
# ----------------------------------------------------------------------------
def _gemm_bias_act_kernel(x_ref, w_ref, b_ref, o_ref, *, act):
    acc = jnp.dot(x_ref[...], w_ref[...], preferred_element_type=jnp.float32)
    y = acc + b_ref[...]                      # f32 epilogue (v5e has no bf16 VPU)
    if act == "relu":
        y = jnp.maximum(y, 0.0)
    elif act == "tanh":
        y = jnp.tanh(y)
    o_ref[...] = y.astype(o_ref.dtype)


def matmul_bias_act(x, w_p, b_p, n_out, act="none", out_dtype=jnp.bfloat16):
    """act(x @ W + b).

    x    : (M, K)   bf16 (un-padded)
    w_p  : (Kp, Np) bf16, pre-padded GEMM-layout weight (multiples of 128)
    b_p  : (1, Np)  f32, pre-padded bias
    returns (M, n_out) out_dtype.
    """
    M, K = x.shape
    Kp, Np = w_p.shape
    Mp = _round_up(M, 8)                       # sublane rule only; no 128-pad of M
    x_p = _pad2(x.astype(jnp.bfloat16), (Mp, Kp))

    # >=2 parallel grid steps when M allows it -> both v7x TensorCores busy.
    # (Np is 128 for every conv layer in this config; for wider layers on
    # v6e/v7x a 256-wide N tile would be preferred.)
    tm = 64 if Mp % 128 == 0 else Mp
    tn = 128

    out = pl.pallas_call(
        functools.partial(_gemm_bias_act_kernel, act=act),
        grid=(Mp // tm, Np // tn),
        in_specs=[
            pl.BlockSpec((tm, Kp), lambda i, j: (i, 0)),
            pl.BlockSpec((Kp, tn), lambda i, j: (0, j)),
            pl.BlockSpec((1, tn), lambda i, j: (0, j)),
        ],
        out_specs=pl.BlockSpec((tm, tn), lambda i, j: (i, j)),
        out_shape=jax.ShapeDtypeStruct((Mp, Np), out_dtype),
        compiler_params=pltpu.CompilerParams(
            dimension_semantics=("parallel", "parallel"),
            vmem_limit_bytes=_VMEM_LIMIT),
    )(x_p, w_p, b_p)
    return out[:M, :n_out]


# ----------------------------------------------------------------------------
# Fused latent head: (fc_mu | fc_var) -> reparameterize -> KLD -> fc_z_up
# ----------------------------------------------------------------------------
def _latent_kernel(h_ref, eps_ref, wmv_ref, bmv_ref, wup_ref, bup_ref,
                   mu_ref, logvar_ref, z_ref, kld_ref, zup_ref, *, batch, zp):
    h = h_ref[...]                                           # bf16
    # single fused (mu | logvar) GEMM; bf16 operands, f32 accumulation
    mv = (jnp.dot(h, wmv_ref[...], preferred_element_type=jnp.float32)
          + bmv_ref[...])
    mu = mv[:, :zp]
    logvar = mv[:, zp:]
    std = jnp.exp(0.5 * logvar)
    z = eps_ref[...] * std + mu

    mu_ref[...] = mu
    logvar_ref[...] = logvar
    z_ref[...] = z

    # KLD = -0.5 * sum(1 + logvar - mu^2 - exp(logvar)).
    # Padded z columns contribute exactly 0 (zero weight/bias padding);
    # padded batch rows are masked (bias makes them non-zero).
    row = lax.broadcasted_iota(jnp.int32, mu.shape, 0)
    valid = (row < batch).astype(jnp.float32)
    kld_ref[...] = jnp.sum(
        -0.5 * (1.0 + logvar - mu * mu - jnp.exp(logvar)) * valid,
        keepdims=True)

    zup_ref[...] = (
        jnp.dot(z.astype(jnp.bfloat16), wup_ref[...],
                preferred_element_type=jnp.float32)
        + bup_ref[...]).astype(zup_ref.dtype)


def latent_path(h_flat, eps, lat_params, batch, z_dim, hdim):
    wmv_p, bmv_p, wup_p, bup_p = lat_params
    Hp, zp2 = wmv_p.shape
    Zp = zp2 // 2
    Bp = _round_up(batch, 8)
    h_p = _pad2(h_flat.astype(jnp.bfloat16), (Bp, Hp))
    eps_p = _pad2(eps.astype(jnp.float32), (Bp, Zp))

    in_arrays = (h_p, eps_p, wmv_p, bmv_p, wup_p, bup_p)
    out_shapes = [(Bp, Zp), (Bp, Zp), (Bp, Zp), (1, 1), (Bp, Hp)]
    out_dtypes = [jnp.float32, jnp.float32, jnp.float32, jnp.float32,
                  jnp.bfloat16]

    mu, logvar, z, kld, z_up = pl.pallas_call(
        functools.partial(_latent_kernel, batch=batch, zp=Zp),
        grid=(1,),
        in_specs=[pl.BlockSpec(a.shape, lambda i: (0, 0)) for a in in_arrays],
        out_specs=[pl.BlockSpec(s, lambda i: (0, 0)) for s in out_shapes],
        out_shape=tuple(jax.ShapeDtypeStruct(s, d)
                        for s, d in zip(out_shapes, out_dtypes)),
        compiler_params=pltpu.CompilerParams(
            dimension_semantics=("arbitrary",),
            vmem_limit_bytes=_VMEM_LIMIT),
    )(*in_arrays)

    return (mu[:batch, :z_dim], logvar[:batch, :z_dim], z[:batch, :z_dim],
            kld[0, 0], z_up[:batch, :hdim])


# ----------------------------------------------------------------------------
# Conv / ConvTranspose wrappers — NHWC end-to-end, jit-fused im2col glue,
# Pallas GEMM hot path.
# ----------------------------------------------------------------------------
def conv2d_stride2_reflect_nhwc(x, w_p, b_p, cout):
    """nn.Conv2d(k=3, s=2, p=1, padding_mode='reflect') + ReLU. NHWC in/out."""
    B, H, W, C = x.shape
    Ho, Wo = H // 2, W // 2
    xp = jnp.pad(x, ((0, 0), (1, 1), (1, 1), (0, 0)), mode="reflect")
    # Tap-major im2col along the channel (lane) axis -> no transposes at all.
    # TODO(synk): move this patch extraction in-kernel (pl.ds shifted windows
    # over a VMEM-resident NHWC tile) to kill the 9x read amplification for
    # large images.
    p = jnp.concatenate(
        [xp[:, dy:dy + 2 * Ho:2, dx:dx + 2 * Wo:2, :]
         for dy in range(3) for dx in range(3)], axis=-1)
    p = p.reshape(B * Ho * Wo, 9 * C)
    y = matmul_bias_act(p, w_p, b_p, cout, act="relu", out_dtype=jnp.bfloat16)
    return y.reshape(B, Ho, Wo, cout)


def conv_transpose2d_subpixel_nhwc(x, w_p, b_p, cout, act, out_dtype):
    """nn.ConvTranspose2d(k=4, s=2, p=1) (+act) as 4 sub-pixel phases of one
    3x3-patch GEMM + NHWC pixel shuffle. NHWC in/out."""
    B, H, W, C = x.shape
    xp = jnp.pad(x, ((0, 0), (1, 1), (1, 1), (0, 0)))        # zero pad 1
    p = jnp.concatenate(
        [xp[:, dy:dy + H, dx:dx + W, :] for dy in range(3) for dx in range(3)],
        axis=-1).reshape(B * H * W, 9 * C)
    y = matmul_bias_act(p, w_p, b_p, 4 * cout, act=act, out_dtype=out_dtype)
    y = y.reshape(B, H, W, 2, 2, cout)                       # (b,h,w,ry,rx,c)
    y = jnp.transpose(y, (0, 1, 3, 2, 4, 5))                 # cheap axis-2/3 swap
    return y.reshape(B, 2 * H, 2 * W, cout)


# ----------------------------------------------------------------------------
# Parameter construction (GEMM-layout, padded, bf16 weights built once at init)
# ----------------------------------------------------------------------------
def _prep_gemm(w, b):
    """(K, N) f32 weight, (N,) bias -> (Kp, Np) bf16 weight, (1, Np) f32 bias."""
    K, N = w.shape
    Kp, Np = _round_up(K, LANE), _round_up(N, LANE)
    return (_pad2(w.astype(jnp.float32), (Kp, Np)).astype(jnp.bfloat16),
            _pad2(b.reshape(1, N).astype(jnp.float32), (1, Np)))


# (r, d) -> transposed-conv kernel index (k=4, s=2, p=1): k = r - 2*d + 3
_CONVT_TAP = {(0, 0): 3, (0, 1): 1, (1, 1): 2, (1, 2): 0}


def _convT_subpixel_gemm_weight(w, b):
    """w: (Cin, Cout, 4, 4), b: (Cout,) -> GEMM weight (9*Cin, 4*Cout) with rows
    (dy*3+dx)*Cin+ci and columns (ry*2+rx)*Cout+co, plus bias (4*Cout,)."""
    cin, cout = w.shape[0], w.shape[1]
    wc = jnp.zeros((3, 3, cin, 2, 2, cout), jnp.float32)
    for (ry, dy), ky in _CONVT_TAP.items():
        for (rx, dx), kx in _CONVT_TAP.items():
            wc = wc.at[dy, dx, :, ry, rx, :].set(w[:, :, ky, kx])
    return wc.reshape(9 * cin, 4 * cout), jnp.tile(b, 4)


def init_vae_params(key, layers, image_size, z_dim):
    layers = tuple(layers)
    s0 = image_size // 2 ** (len(layers) - 1)
    hdim = layers[-1] * s0 * s0
    Hp, Zp = _round_up(hdim, LANE), _round_up(z_dim, LANE)

    def uinit(k, shape, fan_in):
        bound = 1.0 / jnp.sqrt(fan_in)
        return jax.random.uniform(k, shape, jnp.float32, -bound, bound)

    keys = iter(jax.random.split(key, 64))
    canon = {"enc": [], "dec": []}     # canonical f32 weights (reference path)
    gemm = {"enc": [], "dec": []}      # GEMM-layout / padded / bf16 weights

    # Encoder convs: Conv2d(layers[i] -> layers[i+1], k=3, s=2, reflect pad)
    for i in range(len(layers) - 1):
        cin, cout = layers[i], layers[i + 1]
        w = uinit(next(keys), (cout, cin, 3, 3), cin * 9)
        b = uinit(next(keys), (cout,), cin * 9)
        canon["enc"].append((w, b))
        wm = jnp.transpose(w, (2, 3, 1, 0)).reshape(9 * cin, cout)  # tap-major
        gemm["enc"].append(_prep_gemm(wm, b))

    # Latent path.  fc_mu / fc_var / fc_z_up act on the NHWC-flattened feature
    # map (equivalent to the PyTorch module up to a fixed permutation of the
    # randomly initialized fc weight rows/cols).
    w_mu = uinit(next(keys), (hdim, z_dim), hdim)
    b_mu = uinit(next(keys), (z_dim,), hdim)
    w_var = uinit(next(keys), (hdim, z_dim), hdim)
    b_var = uinit(next(keys), (z_dim,), hdim)
    w_up = uinit(next(keys), (z_dim, hdim), z_dim)
    b_up = uinit(next(keys), (hdim,), z_dim)
    canon["mu"], canon["var"], canon["up"] = ((w_mu, b_mu), (w_var, b_var),
                                              (w_up, b_up))
    wmv = jnp.concatenate([_pad2(w_mu, (Hp, Zp)), _pad2(w_var, (Hp, Zp))], 1)
    bmv = jnp.concatenate([_pad2(b_mu.reshape(1, -1), (1, Zp)),
                           _pad2(b_var.reshape(1, -1), (1, Zp))], 1)
    gemm["lat"] = (wmv.astype(jnp.bfloat16), bmv,
                   _pad2(w_up, (Zp, Hp)).astype(jnp.bfloat16),
                   _pad2(b_up.reshape(1, -1), (1, Hp)))

    # Decoder transposed convs (sub-pixel phase-combined GEMM weights)
    dec_io = [(layers[i], layers[i - 1]) for i in range(len(layers) - 1, 1, -1)]
    dec_io.append((layers[1], layers[0]))
    for cin, cout in dec_io:
        w = uinit(next(keys), (cin, cout, 4, 4), cin * 16)
        b = uinit(next(keys), (cout,), cin * 16)
        canon["dec"].append((w, b))
        wc, bc = _convT_subpixel_gemm_weight(w, b)
        gemm["dec"].append(_prep_gemm(wc, bc))

    return canon, gemm, s0, hdim


# ----------------------------------------------------------------------------
# Forward (Pallas path)
# ----------------------------------------------------------------------------
def vae_forward(gemm_params, x, eps, *, layers, s0, z_dim):
    layers = tuple(layers)
    B = x.shape[0]
    hdim = layers[-1] * s0 * s0

    # One layout change in: NCHW -> NHWC (channels-last from here on).
    h = jnp.transpose(x, (0, 2, 3, 1)).astype(jnp.bfloat16)

    for i, (w_p, b_p) in enumerate(gemm_params["enc"]):
        h = conv2d_stride2_reflect_nhwc(h, w_p, b_p, layers[i + 1])
    h_flat = h.reshape(B, hdim)                              # NHWC flatten

    mu, logvar, z, kld, z_up = latent_path(
        h_flat, eps, gemm_params["lat"], B, z_dim, hdim)

    h = z_up.reshape(B, s0, s0, layers[-1])                  # NHWC
    dec_io = [(layers[i], layers[i - 1]) for i in range(len(layers) - 1, 1, -1)]
    dec_io.append((layers[1], layers[0]))
    n_dec = len(dec_io)
    for i, ((_, cout), (w_p, b_p)) in enumerate(zip(dec_io, gemm_params["dec"])):
        last = i == n_dec - 1
        h = conv_transpose2d_subpixel_nhwc(
            h, w_p, b_p, cout,
            act="tanh" if last else "relu",
            out_dtype=jnp.float32 if last else jnp.bfloat16)

    # One layout change out: NHWC -> NCHW (PyTorch convention).
    x_hat = jnp.transpose(h, (0, 3, 1, 2))
    return x_hat, z, mu, logvar, kld


# ----------------------------------------------------------------------------
# Pure-JAX f32 reference (XLA convs) with the same weight conventions
# ----------------------------------------------------------------------------
def vae_reference(canon, x, eps, *, layers, s0, z_dim):
    layers = tuple(layers)
    B = x.shape[0]
    h = x
    for w, b in canon["enc"]:
        hp = jnp.pad(h, ((0, 0), (0, 0), (1, 1), (1, 1)), mode="reflect")
        h = lax.conv_general_dilated(
            hp, w, window_strides=(2, 2), padding="VALID",
            dimension_numbers=("NCHW", "OIHW", "NCHW"))
        h = jnp.maximum(h + b[None, :, None, None], 0.0)
    h_flat = jnp.transpose(h, (0, 2, 3, 1)).reshape(B, -1)   # NHWC flatten
    w_mu, b_mu = canon["mu"]
    w_var, b_var = canon["var"]
    w_up, b_up = canon["up"]
    mu = h_flat @ w_mu + b_mu
    logvar = h_flat @ w_var + b_var
    z = eps * jnp.exp(0.5 * logvar) + mu
    kld = -0.5 * jnp.sum(1.0 + logvar - mu ** 2 - jnp.exp(logvar))
    h = (z @ w_up + b_up).reshape(B, s0, s0, layers[-1]).transpose(0, 3, 1, 2)
    n_dec = len(canon["dec"])
    for i, (w, b) in enumerate(canon["dec"]):
        # ConvTranspose2d(k=4,s=2,p=1) == dilated conv with flipped OIHW kernel.
        wr = jnp.transpose(jnp.flip(w, (2, 3)), (1, 0, 2, 3))
        h = lax.conv_general_dilated(
            h, wr, window_strides=(1, 1), padding=((2, 2), (2, 2)),
            lhs_dilation=(2, 2), dimension_numbers=("NCHW", "OIHW", "NCHW"))
        h = h + b[None, :, None, None]
        h = jnp.tanh(h) if i == n_dec - 1 else jnp.maximum(h, 0.0)
    return h, z, mu, logvar, kld


# ----------------------------------------------------------------------------
if __name__ == "__main__":
    # opt.layers = [4, 8, 16], opt.image_size = 16, opt.z_dim = 8, batch = 2
    layers = (4, 8, 16)
    image_size = 16
    z_dim = 8
    batch = 2

    key = jax.random.PRNGKey(0)
    k_param, k_x, k_eps = jax.random.split(key, 3)
    canon, gemm_params, s0, hdim = init_vae_params(
        k_param, layers, image_size, z_dim)

    x = jax.random.normal(k_x, (batch, layers[0], image_size, image_size),
                          dtype=jnp.float32)
    # eps ~ randn_like(std); generated deterministically outside the kernel.
    eps = jax.random.normal(k_eps, (batch, z_dim), dtype=jnp.float32)

    fwd = jax.jit(functools.partial(vae_forward, layers=layers, s0=s0,
                                    z_dim=z_dim))
    x_hat, z, mu, logvar, kld = fwd(gemm_params, x, eps)
    jax.block_until_ready((x_hat, z, mu, logvar, kld))

    assert x_hat.shape == x.shape, x_hat.shape
    assert z.shape == (batch, z_dim)
    assert mu.shape == (batch, z_dim)
    assert logvar.shape == (batch, z_dim)
    assert kld.shape == ()

    # Correctness check against a pure-JAX f32 reference (loose tolerances:
    # the Pallas path uses bf16 GEMM operands / intermediate activations).
    r_xhat, r_z, r_mu, r_logvar, r_kld = vae_reference(
        canon, x, eps, layers=layers, s0=s0, z_dim=z_dim)
    for name, got, ref, tol in (("x_hat", x_hat, r_xhat, 0.1),
                                ("z", z, r_z, 0.1),
                                ("mu", mu, r_mu, 0.1),
                                ("logvar", logvar, r_logvar, 0.1)):
        err = float(jnp.max(jnp.abs(got - ref)))
        assert err < tol, (name, err)
    assert abs(float(kld) - float(r_kld)) < 0.5, (float(kld), float(r_kld))

    print("KERNEL_OK")
</pallas_src>

<mosaic_0001>
module attributes {stable_mosaic.version = 11 : i64} {
  func.func @_gemm_bias_act_kernel(%arg0: i32, %arg1: i32, %arg2: memref<64x128xbf16, #tpu.memory_space<vmem>>, %arg3: memref<128x128xbf16, #tpu.memory_space<vmem>>, %arg4: memref<1x128xf32, #tpu.memory_space<vmem>>, %arg5: memref<64x128xbf16, #tpu.memory_space<vmem>>) attributes {dimension_semantics = [#tpu.dimension_semantics<parallel>, #tpu.dimension_semantics<parallel>], iteration_bounds = array<i64: 2, 1>, scalar_prefetch = 0 : i64, scratch_operands = 0 : i64, tpu.core_type = #tpu.core_type<tc>, window_params = [{transform_indices = @transform_0, window_bounds = array<i64: 64, 128>}, {transform_indices = @transform_1, window_bounds = array<i64: 128, 128>}, {transform_indices = @transform_2, window_bounds = array<i64: 1, 128>}, {transform_indices = @transform_3, window_bounds = array<i64: 64, 128>}]} {
    %c0 = arith.constant 0 : index
    %c0_0 = arith.constant 0 : index
    %0 = vector.load %arg2[%c0, %c0_0] : memref<64x128xbf16, #tpu.memory_space<vmem>>, vector<64x128xbf16>
    %c0_1 = arith.constant 0 : index
    %c0_2 = arith.constant 0 : index
    %1 = vector.load %arg3[%c0_1, %c0_2] : memref<128x128xbf16, #tpu.memory_space<vmem>>, vector<128x128xbf16>
    %cst = arith.constant dense<0.000000e+00> : vector<64x128xf32>
    %2 = tpu.matmul %0, %1, %cst {dimension_numbers = #tpu.dot_dimension_numbers<[1], [0], [0], [1], [0, 0, 1, 1], [], []>} : vector<64x128xbf16>, vector<128x128xbf16>, vector<64x128xf32> -> vector<64x128xf32>
    %c0_3 = arith.constant 0 : index
    %c0_4 = arith.constant 0 : index
    %3 = vector.load %arg4[%c0_3, %c0_4] : memref<1x128xf32, #tpu.memory_space<vmem>>, vector<1x128xf32>
    %4 = vector.broadcast %3 : vector<1x128xf32> to vector<64x128xf32>
    %5 = arith.addf %2, %4 : vector<64x128xf32>
    %cst_5 = arith.constant 0.000000e+00 : f32
    %6 = vector.broadcast %cst_5 : f32 to vector<64x128xf32>
    %7 = arith.maximumf %5, %6 : vector<64x128xf32>
    %8 = arith.truncf %7 : vector<64x128xf32> to vector<64x128xbf16>
    %c0_6 = arith.constant 0 : index
    %c0_7 = arith.constant 0 : index
    %9 = vector.load %arg5[%c0_6, %c0_7] : memref<64x128xbf16, #tpu.memory_space<vmem>>, vector<64x128xbf16>
    tpu.vector_store %arg5[%c0_6, %c0_7], %8 {strides = array<i32>} : memref<64x128xbf16, #tpu.memory_space<vmem>>, vector<64x128xbf16>,
    return
  }
  func.func @transform_0(%arg0: i32, %arg1: i32) -> (i32, i32) {
    %c0_i32 = arith.constant 0 : i32
    %c0_i32_0 = arith.constant 0 : i32
    return %arg0, %c0_i32 : i32, i32
  }
  func.func @transform_1(%arg0: i32, %arg1: i32) -> (i32, i32) {
    %c0_i32 = arith.constant 0 : i32
    %c0_i32_0 = arith.constant 0 : i32
    return %c0_i32, %arg1 : i32, i32
  }
  func.func @transform_2(%arg0: i32, %arg1: i32) -> (i32, i32) {
    %c0_i32 = arith.constant 0 : i32
    %c0_i32_0 = arith.constant 0 : i32
    return %c0_i32, %arg1 : i32, i32
  }
  func.func @transform_3(%arg0: i32, %arg1: i32) -> (i32, i32) {
    %c0_i32 = arith.constant 0 : i32
    return %arg0, %arg1 : i32, i32
  }
}

module attributes {stable_mosaic.version = 11 : i64} {
  func.func @_gemm_bias_act_kernel(%arg0: i32, %arg1: i32, %arg2: memref<32x128xbf16, #tpu.memory_space<vmem>>, %arg3: memref<128x128xbf16, #tpu.memory_space<vmem>>, %arg4: memref<1x128xf32, #tpu.memory_space<vmem>>, %arg5: memref<32x128xbf16, #tpu.memory_space<vmem>>) attributes {dimension_semantics = [#tpu.dimension_semantics<parallel>, #tpu.dimension_semantics<parallel>], iteration_bounds = array<i64: 1, 1>, scalar_prefetch = 0 : i64, scratch_operands = 0 : i64, tpu.core_type = #tpu.core_type<tc>, window_params = [{transform_indices = @transform_0, window_bounds = array<i64: 32, 128>}, {transform_indices = @transform_1, window_bounds = array<i64: 128, 128>}, {transform_indices = @transform_2, window_bounds = array<i64: 1, 128>}, {transform_indices = @transform_3, window_bounds = array<i64: 32, 128>}]} {
    %c0 = arith.constant 0 : index
    %c0_0 = arith.constant 0 : index
    %0 = vector.load %arg2[%c0, %c0_0] : memref<32x128xbf16, #tpu.memory_space<vmem>>, vector<32x128xbf16>
    %c0_1 = arith.constant 0 : index
    %c0_2 = arith.constant 0 : index
    %1 = vector.load %arg3[%c0_1, %c0_2] : memref<128x128xbf16, #tpu.memory_space<vmem>>, vector<128x128xbf16>
    %cst = arith.constant dense<0.000000e+00> : vector<32x128xf32>
    %2 = tpu.matmul %0, %1, %cst {dimension_numbers = #tpu.dot_dimension_numbers<[1], [0], [0], [1], [0, 0, 1, 1], [], []>} : vector<32x128xbf16>, vector<128x128xbf16>, vector<32x128xf32> -> vector<32x128xf32>
    %c0_3 = arith.constant 0 : index
    %c0_4 = arith.constant 0 : index
    %3 = vector.load %arg4[%c0_3, %c0_4] : memref<1x128xf32, #tpu.memory_space<vmem>>, vector<1x128xf32>
    %4 = vector.broadcast %3 : vector<1x128xf32> to vector<32x128xf32>
    %5 = arith.addf %2, %4 : vector<32x128xf32>
    %cst_5 = arith.constant 0.000000e+00 : f32
    %6 = vector.broadcast %cst_5 : f32 to vector<32x128xf32>
    %7 = arith.maximumf %5, %6 : vector<32x128xf32>
    %8 = arith.truncf %7 : vector<32x128xf32> to vector<32x128xbf16>
    %c0_6 = arith.constant 0 : index
    %c0_7 = arith.constant 0 : index
    %9 = vector.load %arg5[%c0_6, %c0_7] : memref<32x128xbf16, #tpu.memory_space<vmem>>, vector<32x128xbf16>
    tpu.vector_store %arg5[%c0_6, %c0_7], %8 {strides = array<i32>} : memref<32x128xbf16, #tpu.memory_space<vmem>>, vector<32x128xbf16>,
    return
  }
  func.func @transform_0(%arg0: i32, %arg1: i32) -> (i32, i32) {
    %c0_i32 = arith.constant 0 : i32
    %c0_i32_0 = arith.constant 0 : i32
    return %arg0, %c0_i32 : i32, i32
  }
  func.func @transform_1(%arg0: i32, %arg1: i32) -> (i32, i32) {
    %c0_i32 = arith.constant 0 : i32
    %c0_i32_0 = arith.constant 0 : i32
    return %c0_i32, %arg1 : i32, i32
  }
  func.func @transform_2(%arg0: i32, %arg1: i32) -> (i32, i32) {
    %c0_i32 = arith.constant 0 : i32
    %c0_i32_0 = arith.constant 0 : i32
    return %c0_i32, %arg1 : i32, i32
  }
  func.func @transform_3(%arg0: i32, %arg1: i32) -> (i32, i32) {
    %c0_i32 = arith.constant 0 : i32
    return %arg0, %arg1 : i32, i32
  }
}

module attributes {stable_mosaic.version = 11 : i64} {
  func.func @_latent_kernel(%arg0: i32, %arg1: memref<8x256xbf16, #tpu.memory_space<vmem>>, %arg2: memref<8x128xf32, #tpu.memory_space<vmem>>, %arg3: memref<256x256xbf16, #tpu.memory_space<vmem>>, %arg4: memref<1x256xf32, #tpu.memory_space<vmem>>, %arg5: memref<128x256xbf16, #tpu.memory_space<vmem>>, %arg6: memref<1x256xf32, #tpu.memory_space<vmem>>, %arg7: memref<8x128xf32, #tpu.memory_space<vmem>>, %arg8: memref<8x128xf32, #tpu.memory_space<vmem>>, %arg9: memref<8x128xf32, #tpu.memory_space<vmem>>, %arg10: memref<1x1xf32, #tpu.memory_space<vmem>>, %arg11: memref<8x256xbf16, #tpu.memory_space<vmem>>) attributes {dimension_semantics = [#tpu.dimension_semantics<arbitrary>], iteration_bounds = array<i64: 1>, scalar_prefetch = 0 : i64, scratch_operands = 0 : i64, tpu.core_type = #tpu.core_type<tc>, window_params = [{pipeline_mode = #tpu.pipeline_mode<synchronous>, transform_indices = @transform_0, window_bounds = array<i64: 8, 256>}, {pipeline_mode = #tpu.pipeline_mode<synchronous>, transform_indices = @transform_1, window_bounds = array<i64: 8, 128>}, {pipeline_mode = #tpu.pipeline_mode<synchronous>, transform_indices = @transform_2, window_bounds = array<i64: 256, 256>}, {pipeline_mode = #tpu.pipeline_mode<synchronous>, transform_indices = @transform_3, window_bounds = array<i64: 1, 256>}, {pipeline_mode = #tpu.pipeline_mode<synchronous>, transform_indices = @transform_4, window_bounds = array<i64: 128, 256>}, {pipeline_mode = #tpu.pipeline_mode<synchronous>, transform_indices = @transform_5, window_bounds = array<i64: 1, 256>}, {pipeline_mode = #tpu.pipeline_mode<synchronous>, transform_indices = @transform_6, window_bounds = array<i64: 8, 128>}, {pipeline_mode = #tpu.pipeline_mode<synchronous>, transform_indices = @transform_7, window_bounds = array<i64: 8, 128>}, {pipeline_mode = #tpu.pipeline_mode<synchronous>, transform_indices = @transform_8, window_bounds = array<i64: 8, 128>}, {pipeline_mode = #tpu.pipeline_mode<synchronous>, transform_indices = @transform_9, window_bounds = array<i64: 1, 1>}, {pipeline_mode = #tpu.pipeline_mode<synchronous>, transform_indices = @transform_10, window_bounds = array<i64: 8, 256>}]} {
    %c0 = arith.constant 0 : index
    %c0_0 = arith.constant 0 : index
    %0 = vector.load %arg1[%c0, %c0_0] : memref<8x256xbf16, #tpu.memory_space<vmem>>, vector<8x256xbf16>
    %c0_1 = arith.constant 0 : index
    %c0_2 = arith.constant 0 : index
    %1 = vector.load %arg3[%c0_1, %c0_2] : memref<256x256xbf16, #tpu.memory_space<vmem>>, vector<256x256xbf16>
    %cst = arith.constant dense<0.000000e+00> : vector<8x256xf32>
    %2 = tpu.matmul %0, %1, %cst {dimension_numbers = #tpu.dot_dimension_numbers<[1], [0], [0], [1], [0, 0, 1, 1], [], []>} : vector<8x256xbf16>, vector<256x256xbf16>, vector<8x256xf32> -> vector<8x256xf32>
    %c0_3 = arith.constant 0 : index
    %c0_4 = arith.constant 0 : index
    %3 = vector.load %arg4[%c0_3, %c0_4] : memref<1x256xf32, #tpu.memory_space<vmem>>, vector<1x256xf32>
    %4 = vector.broadcast %3 : vector<1x256xf32> to vector<8x256xf32>
    %5 = arith.addf %2, %4 : vector<8x256xf32>
    %6 = vector.extract_strided_slice %5 {offsets = [0, 0], sizes = [8, 128], strides = [1, 1]} : vector<8x256xf32> to vector<8x128xf32>
    %7 = vector.extract_strided_slice %5 {offsets = [0, 128], sizes = [8, 128], strides = [1, 1]} : vector<8x256xf32> to vector<8x128xf32>
    %cst_5 = arith.constant 5.000000e-01 : f32
    %8 = vector.broadcast %cst_5 : f32 to vector<8x128xf32>
    %9 = arith.mulf %8, %7 : vector<8x128xf32>
    %10 = math.exp %9 : vector<8x128xf32>
    %c0_6 = arith.constant 0 : index
    %c0_7 = arith.constant 0 : index
    %11 = vector.load %arg2[%c0_6, %c0_7] : memref<8x128xf32, #tpu.memory_space<vmem>>, vector<8x128xf32>
    %12 = arith.mulf %11, %10 : vector<8x128xf32>
    %13 = arith.addf %12, %6 : vector<8x128xf32>
    %c0_8 = arith.constant 0 : index
    %c0_9 = arith.constant 0 : index
    %14 = vector.load %arg7[%c0_8, %c0_9] : memref<8x128xf32, #tpu.memory_space<vmem>>, vector<8x128xf32>
    tpu.vector_store %arg7[%c0_8, %c0_9], %6 {strides = array<i32>} : memref<8x128xf32, #tpu.memory_space<vmem>>, vector<8x128xf32>,
    %c0_10 = arith.constant 0 : index
    %c0_11 = arith.constant 0 : index
    %15 = vector.load %arg8[%c0_10, %c0_11] : memref<8x128xf32, #tpu.memory_space<vmem>>, vector<8x128xf32>
    tpu.vector_store %arg8[%c0_10, %c0_11], %7 {strides = array<i32>} : memref<8x128xf32, #tpu.memory_space<vmem>>, vector<8x128xf32>,
    %c0_12 = arith.constant 0 : index
    %c0_13 = arith.constant 0 : index
    %16 = vector.load %arg9[%c0_12, %c0_13] : memref<8x128xf32, #tpu.memory_space<vmem>>, vector<8x128xf32>
    tpu.vector_store %arg9[%c0_12, %c0_13], %13 {strides = array<i32>} : memref<8x128xf32, #tpu.memory_space<vmem>>, vector<8x128xf32>,
    %17 = tpu.iota {dimensions = array<i32: 0>} : vector<8x128xi32>
    %c2_i32 = arith.constant 2 : i32
    %18 = vector.broadcast %c2_i32 : i32 to vector<8x128xi32>
    %19 = arith.cmpi slt, %17, %18 : vector<8x128xi32>
    %20 = arith.extui %19 : vector<8x128xi1> to vector<8x128xi32>
    %21 = arith.sitofp %20 : vector<8x128xi32> to vector<8x128xf32>
    %cst_14 = arith.constant 1.000000e+00 : f32
    %22 = vector.broadcast %cst_14 : f32 to vector<8x128xf32>
    %23 = arith.addf %22, %7 : vector<8x128xf32>
    %24 = arith.mulf %6, %6 : vector<8x128xf32>
    %25 = arith.subf %23, %24 : vector<8x128xf32>
    %26 = math.exp %7 : vector<8x128xf32>
    %27 = arith.subf %25, %26 : vector<8x128xf32>
    %cst_15 = arith.constant -5.000000e-01 : f32
    %28 = vector.broadcast %cst_15 : f32 to vector<8x128xf32>
    %29 = arith.mulf %28, %27 : vector<8x128xf32>
    %30 = arith.mulf %29, %21 : vector<8x128xf32>
    %31 = vector.shape_cast %30 : vector<8x128xf32> to vector<1x8x128xf32>
    %cst_16 = arith.constant dense<0.000000e+00> : vector<1xf32>
    %32 = vector.multi_reduction <add>, %31, %cst_16 [1, 2] : vector<1x8x128xf32> to vector<1xf32>
    %33 = vector.shape_cast %32 : vector<1xf32> to vector<1x1x1xf32>
    %34 = vector.extract %33[0, 0, 0] : f32 from vector<1x1x1xf32>
    %35 = vector.broadcast %34 : f32 to vector<1x1xf32>
    %c0_17 = arith.constant 0 : index
    %c0_18 = arith.constant 0 : index
    %36 = vector.load %arg10[%c0_17, %c0_18] : memref<1x1xf32, #tpu.memory_space<vmem>>, vector<1x1xf32>
    tpu.vector_store %arg10[%c0_17, %c0_18], %35 {strides = array<i32>} : memref<1x1xf32, #tpu.memory_space<vmem>>, vector<1x1xf32>,
    %37 = arith.truncf %13 : vector<8x128xf32> to vector<8x128xbf16>
    %c0_19 = arith.constant 0 : index
    %c0_20 = arith.constant 0 : index
    %38 = vector.load %arg5[%c0_19, %c0_20] : memref<128x256xbf16, #tpu.memory_space<vmem>>, vector<128x256xbf16>
    %cst_21 = arith.constant dense<0.000000e+00> : vector<8x256xf32>
    %39 = tpu.matmul %37, %38, %cst_21 {dimension_numbers = #tpu.dot_dimension_numbers<[1], [0], [0], [1], [0, 0, 1, 1], [], []>} : vector<8x128xbf16>, vector<128x256xbf16>, vector<8x256xf32> -> vector<8x256xf32>
    %c0_22 = arith.constant 0 : index
    %c0_23 = arith.constant 0 : index
    %40 = vector.load %arg6[%c0_22, %c0_23] : memref<1x256xf32, #tpu.memory_space<vmem>>, vector<1x256xf32>
    %41 = vector.broadcast %40 : vector<1x256xf32> to vector<8x256xf32>
    %42 = arith.addf %39, %41 : vector<8x256xf32>
    %43 = arith.truncf %42 : vector<8x256xf32> to vector<8x256xbf16>
    %c0_24 = arith.constant 0 : index
    %c0_25 = arith.constant 0 : index
    %44 = vector.load %arg11[%c0_24, %c0_25] : memref<8x256xbf16, #tpu.memory_space<vmem>>, vector<8x256xbf16>
    tpu.vector_store %arg11[%c0_24, %c0_25], %43 {strides = array<i32>} : memref<8x256xbf16, #tpu.memory_space<vmem>>, vector<8x256xbf16>,
    return
  }
  func.func @transform_0(%arg0: i32) -> (i32, i32) {
    %c0_i32 = arith.constant 0 : i32
    %c0_i32_0 = arith.constant 0 : i32
    %c0_i32_1 = arith.constant 0 : i32
    return %c0_i32, %c0_i32_0 : i32, i32
  }
  func.func @transform_1(%arg0: i32) -> (i32, i32) {
    %c0_i32 = arith.constant 0 : i32
    %c0_i32_0 = arith.constant 0 : i32
    %c0_i32_1 = arith.constant 0 : i32
    return %c0_i32, %c0_i32_0 : i32, i32
  }
  func.func @transform_2(%arg0: i32) -> (i32, i32) {
    %c0_i32 = arith.constant 0 : i32
    %c0_i32_0 = arith.constant 0 : i32
    %c0_i32_1 = arith.constant 0 : i32
    return %c0_i32, %c0_i32_0 : i32, i32
  }
  func.func @transform_3(%arg0: i32) -> (i32, i32) {
    %c0_i32 = arith.constant 0 : i32
    %c0_i32_0 = arith.constant 0 : i32
    %c0_i32_1 = arith.constant 0 : i32
    return %c0_i32, %c0_i32_0 : i32, i32
  }
  func.func @transform_4(%arg0: i32) -> (i32, i32) {
    %c0_i32 = arith.constant 0 : i32
    %c0_i32_0 = arith.constant 0 : i32
    %c0_i32_1 = arith.constant 0 : i32
    return %c0_i32, %c0_i32_0 : i32, i32
  }
  func.func @transform_5(%arg0: i32) -> (i32, i32) {
    %c0_i32 = arith.constant 0 : i32
    %c0_i32_0 = arith.constant 0 : i32
    %c0_i32_1 = arith.constant 0 : i32
    return %c0_i32, %c0_i32_0 : i32, i32
  }
  func.func @transform_6(%arg0: i32) -> (i32, i32) {
    %c0_i32 = arith.constant 0 : i32
    %c0_i32_0 = arith.constant 0 : i32
    %c0_i32_1 = arith.constant 0 : i32
    return %c0_i32, %c0_i32_0 : i32, i32
  }
  func.func @transform_7(%arg0: i32) -> (i32, i32) {
    %c0_i32 = arith.constant 0 : i32
    %c0_i32_0 = arith.constant 0 : i32
    %c0_i32_1 = arith.constant 0 : i32
    return %c0_i32, %c0_i32_0 : i32, i32
  }
  func.func @transform_8(%arg0: i32) -> (i32, i32) {
    %c0_i32 = arith.constant 0 : i32
    %c0_i32_0 = arith.constant 0 : i32
    %c0_i32_1 = arith.constant 0 : i32
    return %c0_i32, %c0_i32_0 : i32, i32
  }
  func.func @transform_9(%arg0: i32) -> (i32, i32) {
    %c0_i32 = arith.constant 0 : i32
    %c0_i32_0 = arith.constant 0 : i32
    %c0_i32_1 = arith.constant 0 : i32
    return %c0_i32, %c0_i32_0 : i32, i32
  }
  func.func @transform_10(%arg0: i32) -> (i32, i32) {
    %c0_i32 = arith.constant 0 : i32
    %c0_i32_0 = arith.constant 0 : i32
    %c0_i32_1 = arith.constant 0 : i32
    return %c0_i32, %c0_i32_0 : i32, i32
  }
}

module attributes {stable_mosaic.version = 11 : i64} {
  func.func @_gemm_bias_act_kernel(%arg0: i32, %arg1: i32, %arg2: memref<32x256xbf16, #tpu.memory_space<vmem>>, %arg3: memref<256x128xbf16, #tpu.memory_space<vmem>>, %arg4: memref<1x128xf32, #tpu.memory_space<vmem>>, %arg5: memref<32x128xbf16, #tpu.memory_space<vmem>>) attributes {dimension_semantics = [#tpu.dimension_semantics<parallel>, #tpu.dimension_semantics<parallel>], iteration_bounds = array<i64: 1, 1>, scalar_prefetch = 0 : i64, scratch_operands = 0 : i64, tpu.core_type = #tpu.core_type<tc>, window_params = [{transform_indices = @transform_0, window_bounds = array<i64: 32, 256>}, {transform_indices = @transform_1, window_bounds = array<i64: 256, 128>}, {transform_indices = @transform_2, window_bounds = array<i64: 1, 128>}, {transform_indices = @transform_3, window_bounds = array<i64: 32, 128>}]} {
    %c0 = arith.constant 0 : index
    %c0_0 = arith.constant 0 : index
    %0 = vector.load %arg2[%c0, %c0_0] : memref<32x256xbf16, #tpu.memory_space<vmem>>, vector<32x256xbf16>
    %c0_1 = arith.constant 0 : index
    %c0_2 = arith.constant 0 : index
    %1 = vector.load %arg3[%c0_1, %c0_2] : memref<256x128xbf16, #tpu.memory_space<vmem>>, vector<256x128xbf16>
    %cst = arith.constant dense<0.000000e+00> : vector<32x128xf32>
    %2 = tpu.matmul %0, %1, %cst {dimension_numbers = #tpu.dot_dimension_numbers<[1], [0], [0], [1], [0, 0, 1, 1], [], []>} : vector<32x256xbf16>, vector<256x128xbf16>, vector<32x128xf32> -> vector<32x128xf32>
    %c0_3 = arith.constant 0 : index
    %c0_4 = arith.constant 0 : index
    %3 = vector.load %arg4[%c0_3, %c0_4] : memref<1x128xf32, #tpu.memory_space<vmem>>, vector<1x128xf32>
    %4 = vector.broadcast %3 : vector<1x128xf32> to vector<32x128xf32>
    %5 = arith.addf %2, %4 : vector<32x128xf32>
    %cst_5 = arith.constant 0.000000e+00 : f32
    %6 = vector.broadcast %cst_5 : f32 to vector<32x128xf32>
    %7 = arith.maximumf %5, %6 : vector<32x128xf32>
    %8 = arith.truncf %7 : vector<32x128xf32> to vector<32x128xbf16>
    %c0_6 = arith.constant 0 : index
    %c0_7 = arith.constant 0 : index
    %9 = vector.load %arg5[%c0_6, %c0_7] : memref<32x128xbf16, #tpu.memory_space<vmem>>, vector<32x128xbf16>
    tpu.vector_store %arg5[%c0_6, %c0_7], %8 {strides = array<i32>} : memref<32x128xbf16, #tpu.memory_space<vmem>>, vector<32x128xbf16>,
    return
  }
  func.func @transform_0(%arg0: i32, %arg1: i32) -> (i32, i32) {
    %c0_i32 = arith.constant 0 : i32
    %c0_i32_0 = arith.constant 0 : i32
    return %arg0, %c0_i32 : i32, i32
  }
  func.func @transform_1(%arg0: i32, %arg1: i32) -> (i32, i32) {
    %c0_i32 = arith.constant 0 : i32
    %c0_i32_0 = arith.constant 0 : i32
    return %c0_i32, %arg1 : i32, i32
  }
  func.func @transform_2(%arg0: i32, %arg1: i32) -> (i32, i32) {
    %c0_i32 = arith.constant 0 : i32
    %c0_i32_0 = arith.constant 0 : i32
    return %c0_i32, %arg1 : i32, i32
  }
  func.func @transform_3(%arg0: i32, %arg1: i32) -> (i32, i32) {
    %c0_i32 = arith.constant 0 : i32
    return %arg0, %arg1 : i32, i32
  }
}

module attributes {stable_mosaic.version = 11 : i64} {
  func.func @_gemm_bias_act_kernel(%arg0: i32, %arg1: i32, %arg2: memref<64x128xbf16, #tpu.memory_space<vmem>>, %arg3: memref<128x128xbf16, #tpu.memory_space<vmem>>, %arg4: memref<1x128xf32, #tpu.memory_space<vmem>>, %arg5: memref<64x128xf32, #tpu.memory_space<vmem>>) attributes {dimension_semantics = [#tpu.dimension_semantics<parallel>, #tpu.dimension_semantics<parallel>], iteration_bounds = array<i64: 2, 1>, scalar_prefetch = 0 : i64, scratch_operands = 0 : i64, tpu.core_type = #tpu.core_type<tc>, window_params = [{transform_indices = @transform_0, window_bounds = array<i64: 64, 128>}, {transform_indices = @transform_1, window_bounds = array<i64: 128, 128>}, {transform_indices = @transform_2, window_bounds = array<i64: 1, 128>}, {transform_indices = @transform_3, window_bounds = array<i64: 64, 128>}]} {
    %c0 = arith.constant 0 : index
    %c0_0 = arith.constant 0 : index
    %0 = vector.load %arg2[%c0, %c0_0] : memref<64x128xbf16, #tpu.memory_space<vmem>>, vector<64x128xbf16>
    %c0_1 = arith.constant 0 : index
    %c0_2 = arith.constant 0 : index
    %1 = vector.load %arg3[%c0_1, %c0_2] : memref<128x128xbf16, #tpu.memory_space<vmem>>, vector<128x128xbf16>
    %cst = arith.constant dense<0.000000e+00> : vector<64x128xf32>
    %2 = tpu.matmul %0, %1, %cst {dimension_numbers = #tpu.dot_dimension_numbers<[1], [0], [0], [1], [0, 0, 1, 1], [], []>} : vector<64x128xbf16>, vector<128x128xbf16>, vector<64x128xf32> -> vector<64x128xf32>
    %c0_3 = arith.constant 0 : index
    %c0_4 = arith.constant 0 : index
    %3 = vector.load %arg4[%c0_3, %c0_4] : memref<1x128xf32, #tpu.memory_space<vmem>>, vector<1x128xf32>
    %4 = vector.broadcast %3 : vector<1x128xf32> to vector<64x128xf32>
    %5 = arith.addf %2, %4 : vector<64x128xf32>
    %6 = math.tanh %5 : vector<64x128xf32>
    %c0_5 = arith.constant 0 : index
    %c0_6 = arith.constant 0 : index
    %7 = vector.load %arg5[%c0_5, %c0_6] : memref<64x128xf32, #tpu.memory_space<vmem>>, vector<64x128xf32>
    tpu.vector_store %arg5[%c0_5, %c0_6], %6 {strides = array<i32>} : memref<64x128xf32, #tpu.memory_space<vmem>>, vector<64x128xf32>,
    return
  }
  func.func @transform_0(%arg0: i32, %arg1: i32) -> (i32, i32) {
    %c0_i32 = arith.constant 0 : i32
    %c0_i32_0 = arith.constant 0 : i32
    return %arg0, %c0_i32 : i32, i32
  }
  func.func @transform_1(%arg0: i32, %arg1: i32) -> (i32, i32) {
    %c0_i32 = arith.constant 0 : i32
    %c0_i32_0 = arith.constant 0 : i32
    return %c0_i32, %arg1 : i32, i32
  }
  func.func @transform_2(%arg0: i32, %arg1: i32) -> (i32, i32) {
    %c0_i32 = arith.constant 0 : i32
    %c0_i32_0 = arith.constant 0 : i32
    return %c0_i32, %arg1 : i32, i32
  }
  func.func @transform_3(%arg0: i32, %arg1: i32) -> (i32, i32) {
    %c0_i32 = arith.constant 0 : i32
    return %arg0, %arg1 : i32, i32
  }
}

</mosaic_0001>

<llo_original>
// kernel: vae_forward.5
$region0: #{vae_forward.5}
  #allocation0 [shape = 'u32[]', space=smem, size = 0x4, offset = 0x4, fixed_abs, tag = 'smem constant byte address 0x4 - core index']
  #allocation1 [shape = 'u32[144,128]{1,0:T(1,128)}', space=vmem, size = 0x12000, scoped, tag = 'internal scratch']
  %s0 = inlined_call_operand.vmem [shape: bf16[128,128], index: 0, kind: input, shape index: {}]
  %s1 = inlined_call_operand.vmem [shape: bf16[128,128], index: 1, kind: input, shape index: {}]
  %s2 = inlined_call_operand.vmem [shape: f32[1,128], index: 2, kind: input, shape index: {}]
  %s3 = inlined_call_operand.vmem [shape: bf16[128,128], index: 3, kind: output, shape index: {}]
  %s4 = sld [smem:[#allocation0]]
  $region45: #{vae_forward.5} parent=0
    _
  %s6 = ssub.s32 1, %s4
  %s7 = scalar_select 0, %s6, %s4
  loop: start=0, step=1, limit=4
  $region2: #{vae_forward.5} parent=0 // loop_pre_header
    _
  $region3: #{vae_forward.5} parent=0 // loop_header
    %s9 = sphi 0, %s13
    %p10 = scmp.ge.s32.totalorder %s9, 4
    %s16 = sphi 0, %s28
    %s17 = sphi 0, %s24
    %s18 = sphi 0, %s16
    %s19 = sphi 0, %s17
    %s20 = sphi 0, %s18
    %s21 = sphi 0, %s19
    %s31 = sphi 0, %s33
    %s34 = sphi 0, %s31
    %s35 = sphi 0, %s34
    %s51 = sphi 0, %s35
    %s57 = sphi 0, %s59
    %s60 = sphi 0, %s57
    %s61 = sphi 0, %s60
    %s77 = sphi 0, %s61
    %s83 = sphi 0, %s85
    %s86 = sphi 0, %s83
    %s87 = sphi 0, %s86
    %s103 = sphi 0, %s87
    %s111 = sphi 0, %s113
    %s114 = sphi 0, %s111
    %s115 = sphi 0, %s114
    %s131 = sphi 0, %s115
  $region4: #{vae_forward.5} parent=0 // loop_header_branch
    %12 = sbr.rel (%p10) target = $region8
  $region5: #{vae_forward.5} parent=0 // loop_body
    %s14 = ssub.s32 %s9, 1
    %s15 = ssub.s32 %s9, 2
    %s22 = sadd.s32 1, %s17
    %p23 = scmp.ge.s32.totalorder %s22, 1
    %s24 = scalar_select %p23, 0, %s22
    %s25 = sadd.s32 1, %s16
    %s26 = scalar_select %p23, %s25, %s16
    %p27 = scmp.ge.s32.totalorder %s26, 2
    %s28 = scalar_select %p27, 0, %s26
    %s29 = ssub.s32 %s16, %s28
    %p30 = scmp.eq.s32.totalorder %s29, 0
    %s32 = sadd.s32 %s31, 1
    %s33 = scalar_select %p30, %s31, %s32
    %p36 = pneg %p30
    %p37 = scmp.eq.s32.totalorder %s9, 1
    %p38 = por %p36, %p37
    %p39 = scmp.ne.s32.totalorder %s31, %s34
    %p40 = scmp.eq.s32.totalorder %s9, 0
    %p41 = por %p39, %p40
    %p42 = scmp.ne.s32.totalorder %s31, %s34
    %p43 = scmp.eq.s32.totalorder %s14, 1
    %p44 = por %p42, %p43
    %p45 = scmp.ne.s32.totalorder %s34, %s35
    %p46 = scmp.eq.s32.totalorder %s14, 0
    %p47 = por %p45, %p46
    %p48 = scmp.ne.s32.totalorder %s34, %s35
    %p49 = scmp.eq.s32.totalorder %s15, 1
    %p50 = por %p48, %p49
    %p52 = scmp.ne.s32.totalorder %s35, %s51
    %p53 = scmp.eq.s32.totalorder %s15, 0
    %p54 = por %p52, %p53
    %s55 = ssub.s32 %s17, %s24
    %p56 = scmp.eq.s32.totalorder %s55, 0
    %s58 = sadd.s32 %s57, 1
    %s59 = scalar_select %p56, %s57, %s58
    %p62 = pneg %p56
    %p63 = scmp.eq.s32.totalorder %s9, 1
    %p64 = por %p62, %p63
    %p65 = scmp.ne.s32.totalorder %s57, %s60
    %p66 = scmp.eq.s32.totalorder %s9, 0
    %p67 = por %p65, %p66
    %p68 = scmp.ne.s32.totalorder %s57, %s60
    %p69 = scmp.eq.s32.totalorder %s14, 1
    %p70 = por %p68, %p69
    %p71 = scmp.ne.s32.totalorder %s60, %s61
    %p72 = scmp.eq.s32.totalorder %s14, 0
    %p73 = por %p71, %p72
    %p74 = scmp.ne.s32.totalorder %s60, %s61
    %p75 = scmp.eq.s32.totalorder %s15, 1
    %p76 = por %p74, %p75
    %p78 = scmp.ne.s32.totalorder %s61, %s77
    %p79 = scmp.eq.s32.totalorder %s15, 0
    %p80 = por %p78, %p79
    %s81 = ssub.s32 %s17, %s24
    %p82 = scmp.eq.s32.totalorder %s81, 0
    %s84 = sadd.s32 %s83, 1
    %s85 = scalar_select %p82, %s83, %s84
    %p88 = pneg %p82
    %p89 = scmp.eq.s32.totalorder %s9, 1
    %p90 = por %p88, %p89
    %p91 = scmp.ne.s32.totalorder %s83, %s86
    %p92 = scmp.eq.s32.totalorder %s9, 0
    %p93 = por %p91, %p92
    %p94 = scmp.ne.s32.totalorder %s83, %s86
    %p95 = scmp.eq.s32.totalorder %s14, 1
    %p96 = por %p94, %p95
    %p97 = scmp.ne.s32.totalorder %s86, %s87
    %p98 = scmp.eq.s32.totalorder %s14, 0
    %p99 = por %p97, %p98
    %p100 = scmp.ne.s32.totalorder %s86, %s87
    %p101 = scmp.eq.s32.totalorder %s15, 1
    %p102 = por %p100, %p101
    %p104 = scmp.ne.s32.totalorder %s87, %s103
    %p105 = scmp.eq.s32.totalorder %s15, 0
    %p106 = por %p104, %p105
    %s107 = ssub.s32 %s16, %s28
    %s108 = ssub.s32 %s17, %s24
    %s109 = sor.u32 %s107, %s108
    %p110 = scmp.eq.s32.totalorder %s109, 0
    %s112 = sadd.s32 %s111, 1
    %s113 = scalar_select %p110, %s111, %s112
    %p116 = pneg %p110
    %p117 = scmp.eq.s32.totalorder %s9, 1
    %p118 = por %p116, %p117
    %p119 = scmp.ne.s32.totalorder %s111, %s114
    %p120 = scmp.eq.s32.totalorder %s9, 0
    %p121 = por %p119, %p120
    %p122 = scmp.ne.s32.totalorder %s111, %s114
    %p123 = scmp.eq.s32.totalorder %s14, 1
    %p124 = por %p122, %p123
    %p125 = scmp.ne.s32.totalorder %s114, %s115
    %p126 = scmp.eq.s32.totalorder %s14, 0
    %p127 = por %p125, %p126
    %p128 = scmp.ne.s32.totalorder %s114, %s115
    %p129 = scmp.eq.s32.totalorder %s15, 1
    %p130 = por %p128, %p129
    %p132 = scmp.ne.s32.totalorder %s115, %s131
    %p133 = scmp.eq.s32.totalorder %s15, 0
    %p134 = por %p132, %p133
    %p135 = scmp.le.s32.totalorder 1, %s9
    %p136 = scmp.lt.s32.totalorder %s9, 3
    %p137 = pnand %p135, %p136
    %p138 = pneg %p137
    // Predicated region
    $region9: #{vae_forward.5} parent=5 // pred_check
      _
    $region10: #{vae_forward.5} parent=5 // pred_check_branch
      %140 = sbr.rel (%p137) target = $region12
    $region11: #{vae_forward.5} parent=5 // pred_region
      %s141 = ssub.s32 %s9, 1
      // Predicated region
      $region13: #{vae_forward.5} parent=11 // pred_check
        %p142 = pneg %p73
      $region14: #{vae_forward.5} parent=11 // pred_check_branch
        %144 = sbr.rel (%p142) target = $region16
      $region15: #{vae_forward.5} parent=11 // pred_region
        %p145 = scmp.lt.s32.totalorder %s19, 0
        %s146 = scalar_select %p145, %s19, 0
        %s147 = smul.addr %s146, 4
        %s148 = scalar_lea.vmem %s1, %s147
      $region16: #{vae_forward.5} parent=11 // pred_fallthru
        _
      // Predicated region
      $region17: #{vae_forward.5} parent=11 // pred_check
        %p149 = pneg %p99
      $region18: #{vae_forward.5} parent=11 // pred_check_branch
        %151 = sbr.rel (%p149) target = $region20
      $region19: #{vae_forward.5} parent=11 // pred_region
        %p152 = scmp.lt.s32.totalorder %s19, 0
        %s153 = scalar_select %p152, %s19, 0
        %s154 = scalar_lea.vmem %s2, %s153
      $region20: #{vae_forward.5} parent=11 // pred_fallthru
        _
    $region12: #{vae_forward.5} parent=5 // pred_fallthru
      _
    %p155 = scmp.lt.s32.totalorder %s9, 2
    // Predicated region
    $region21: #{vae_forward.5} parent=5 // pred_check
      %p156 = pneg %p155
    $region22: #{vae_forward.5} parent=5 // pred_check_branch
      %158 = sbr.rel (%p156) target = $region24
    $region23: #{vae_forward.5} parent=5 // pred_region
      // Predicated region
      $region25: #{vae_forward.5} parent=23 // pred_check
        %p159 = pneg %p41
      $region26: #{vae_forward.5} parent=23 // pred_check_branch
        %161 = sbr.rel (%p159) target = $region28
      $region27: #{vae_forward.5} parent=23 // pred_region
        %s162 = smul.u32 8, %s16
        %p163 = scmp.lt.s32.totalorder %s162, 15
        %s164 = scalar_select %p163, %s162, 15
        %s165 = smul.addr %s164, 4
        %s166 = scalar_lea.vmem %s0, %s165
        %s167 = smul.u32 8, %s16
      $region28: #{vae_forward.5} parent=23 // pred_fallthru
        _
    $region24: #{vae_forward.5} parent=5 // pred_fallthru
      _
    %p168 = scmp.le.s32.totalorder 1, %s9
    %p169 = scmp.lt.s32.totalorder %s9, 3
    %p170 = pnand %p168, %p169
    %p171 = pneg %p170
    // Predicated region
    $region29: #{vae_forward.5} parent=5 // pred_check
      _
    $region30: #{vae_forward.5} parent=5 // pred_check_branch
      %173 = sbr.rel (%p170) target = $region32
    $region31: #{vae_forward.5} parent=5 // pred_region
      %s174 = ssub.s32 %s9, 1
      %s175 = smul.u32 8, %s18
      %p176 = scmp.lt.s32.totalorder %s175, 15
      %s177 = scalar_select %p176, %s175, 15
      %s178 = smul.addr %s177, 4
      %s179 = scalar_lea.vmem %s0, %s178
      %p180 = pneg %p47
      %p181 = pneg %p44
      %p182 = scmp.lt.s32.totalorder %s19, 0
      %s183 = scalar_select %p182, %s19, 0
      %s184 = smul.addr %s183, 4
      %s185 = scalar_lea.vmem %s1, %s184
      %p186 = pneg %p73
      %p187 = pneg %p70
      %p188 = scmp.lt.s32.totalorder %s19, 0
      %s189 = scalar_select %p188, %s19, 0
      %s190 = scalar_lea.vmem %s2, %s189
      %p191 = pneg %p99
      %p192 = pneg %p96
      %p193 = pneg %p127
      %p194 = pneg %p124
      %s195 = smul.u32 8, %s18
      %p196 = scmp.lt.s32.totalorder %s195, 15
      %s197 = scalar_select %p196, %s195, 15
      %p198 = scmp.lt.s32.totalorder %s19, 0
      %s199 = scalar_select %p198, %s19, 0
      %s200 = sadd.s32 %s199, %s197
      %s201 = smul.addr %s200, 4
      %s202 = scalar_lea.vmem %s3, %s201
      %s203 = smul.u32 8, %s18
      %p204 = scmp.lt.s32.totalorder %s203, 15
      %s205 = scalar_select %p204, %s203, 15
      %s206 = smul.addr %s205, 4
      %s207 = scalar_lea.vmem %s0, %s206
      %s208 = smul.u32 8, %s18
      %p209 = scmp.lt.s32.totalorder %s19, 0
      %s210 = scalar_select %p209, %s19, 0
      %s211 = smul.addr %s210, 4
      %s212 = scalar_lea.vmem %s1, %s211
      %p213 = scmp.lt.s32.totalorder %s19, 0
      %s214 = scalar_select %p213, %s19, 0
      %s215 = scalar_lea.vmem %s2, %s214
      %s216 = smul.u32 8, %s18
      %p217 = scmp.lt.s32.totalorder %s216, 15
      %s218 = scalar_select %p217, %s216, 15
      %p219 = scmp.lt.s32.totalorder %s19, 0
      %s220 = scalar_select %p219, %s19, 0
      %s221 = sadd.s32 %s220, %s218
      %s222 = smul.addr %s221, 4
      %s223 = scalar_lea.vmem %s3, %s222
      %s224 = smul.u32 8, %s18
      %v226 = vld [vmem:[%s207] sm:$0xf]
      %v227 = vld [vmem:[%s207 + $0x4] sm:$0xf]
      %v228 = vld [vmem:[%s207 + $0x8] sm:$0xf]
      %v229 = vld [vmem:[%s207 + $0xc] sm:$0xf]
      %v230 = vld [vmem:[%s207 + $0x10] sm:$0xf]
      %v231 = vld [vmem:[%s207 + $0x14] sm:$0xf]
      %v232 = vld [vmem:[%s207 + $0x18] sm:$0xf]
      %v233 = vld [vmem:[%s207 + $0x1c] sm:$0xf]
      %v234 = vld [vmem:[%s212] sm:$0xf]
      %v235 = vld [vmem:[%s212 + $0x4] sm:$0xf]
      %v236 = vld [vmem:[%s212 + $0x8] sm:$0xf]
      %v237 = vld [vmem:[%s212 + $0xc] sm:$0xf]
      %v238 = vld [vmem:[%s212 + $0x10] sm:$0xf]
      %v239 = vld [vmem:[%s212 + $0x14] sm:$0xf]
      %v240 = vld [vmem:[%s212 + $0x18] sm:$0xf]
      %v241 = vld [vmem:[%s212 + $0x1c] sm:$0xf]
      %v242 = vld [vmem:[%s212 + $0x20] sm:$0xf]
      %v243 = vld [vmem:[%s212 + $0x24] sm:$0xf]
      %v244 = vld [vmem:[%s212 + $0x28] sm:$0xf]
      %v245 = vld [vmem:[%s212 + $0x2c] sm:$0xf]
      %v246 = vld [vmem:[%s212 + $0x30] sm:$0xf]
      %v247 = vld [vmem:[%s212 + $0x34] sm:$0xf]
      %v248 = vld [vmem:[%s212 + $0x38] sm:$0xf]
      %v249 = vld [vmem:[%s212 + $0x3c] sm:$0xf]
      %v250 = vld [vmem:[%s215] sm:$0x1]
      %v252 = vlaneseq
      %v253 = vshrl.u32 %v252, 7
      %v254 = vsub.s32 0, %v253
      %v255 = vrot.slane %v250, %v254
      %v265 = vunpack.c.l.b16 %v226
      %v266 = vunpack.c.l.b16 %v227
      %v267 = vunpack.c.l.b16 %v228
      %v268 = vunpack.c.l.b16 %v229
      %v269 = vunpack.c.l.b16 %v230
      %v270 = vunpack.c.l.b16 %v231
      %v271 = vunpack.c.l.b16 %v232
      %v272 = vunpack.c.l.b16 %v233
      %v273 = vpack.c.b16 %v266, %v265
      %v274 = vpack.c.b16 %v268, %v267
      %v275 = vpack.c.b16 %v270, %v269
      %v276 = vpack.c.b16 %v272, %v271
      %v297 = vunpack.c.l.b16 %v234
      %v298 = vunpack.c.l.b16 %v235
      %v299 = vunpack.c.l.b16 %v236
      %v300 = vunpack.c.l.b16 %v237
      %v301 = vunpack.c.l.b16 %v238
      %v302 = vunpack.c.l.b16 %v239
      %v303 = vunpack.c.l.b16 %v240
      %v304 = vunpack.c.l.b16 %v241
      %v305 = vunpack.c.l.b16 %v242
      %v306 = vunpack.c.l.b16 %v243
      %v307 = vunpack.c.l.b16 %v244
      %v308 = vunpack.c.l.b16 %v245
      %v309 = vunpack.c.l.b16 %v246
      %v310 = vunpack.c.l.b16 %v247
      %v311 = vunpack.c.l.b16 %v248
      %v312 = vunpack.c.l.b16 %v249
      %v313 = vpack.c.b16 %v298, %v297
      %v314 = vpack.c.b16 %v300, %v299
      %v315 = vpack.c.b16 %v302, %v301
      %v316 = vpack.c.b16 %v304, %v303
      %v317 = vpack.c.b16 %v306, %v305
      %v318 = vpack.c.b16 %v308, %v307
      %v319 = vpack.c.b16 %v310, %v309
      %v320 = vpack.c.b16 %v312, %v311
      %329 = vmatprep.subr.bf16.mxu0 0
      %330 = vmatpush1.bf16.msra.mxu0 %v313
      %331 = vmatprep.subr.bf16.mxu0 0
      %332 = vmatpush1.bf16.msra.mxu0 %v314
      %333 = vmatprep.subr.bf16.mxu0 0
      %334 = vmatpush1.bf16.msra.mxu0 %v315
      %335 = vmatprep.subr.bf16.mxu0 0
      %336 = vmatpush1.bf16.msra.mxu0 %v316
      %337 = vmatprep.subr.bf16.mxu0 0
      %338 = vmatpush1.bf16.msra.mxu0 %v317
      %339 = vmatprep.subr.bf16.mxu0 0
      %340 = vmatpush1.bf16.msra.mxu0 %v318
      %341 = vmatprep.subr.bf16.mxu0 0
      %342 = vmatpush1.bf16.msra.mxu0 %v319
      %343 = vmatprep.subr.bf16.mxu0 0
      %344 = vmatpush1.bf16.msra.mxu0 %v320
      %345 = vmatprep.subr.bf16.mxu0 0
      %346 = vmatpush1.bf16.msra.mxu0 0
      %347 = vmatprep.subr.bf16.mxu0 0
      %348 = vmatpush1.bf16.msra.mxu0 0
      %349 = vmatprep.subr.bf16.mxu0 0
      %350 = vmatpush1.bf16.msra.mxu0 0
      %351 = vmatprep.subr.bf16.mxu0 0
      %352 = vmatpush1.bf16.msra.mxu0 0
      %353 = vmatprep.subr.bf16.mxu0 0
      %354 = vmatpush1.bf16.msra.mxu0 0
      %355 = vmatprep.subr.bf16.mxu0 0
      %356 = vmatpush1.bf16.msra.mxu0 0
      %357 = vmatprep.subr.bf16.mxu0 0
      %358 = vmatpush1.bf16.msra.mxu0 0
      %359 = vmatprep.subr.bf16.mxu0 0
      %360 = vmatpush1.bf16.msra.mxu0 0
      %361 = vmatprep.mubr.bf16.mxu0 0
      %362 = vmatmul.mubr.bf16.gmra.mrb[0].mxu0 %v273
      %v363 = vpop.f32.mrb[0].mxu0
      %v364 = vadd.f32 %v255, %v363
      %v365 = vpop.f32.mrb[0].mxu0
      %v366 = vpop.f32.mrb[0].mxu0
      %v367 = vadd.f32 %v255, %v366
      %v368 = vpop.f32.mrb[0].mxu0
      %369 = vmatprep.mubr.bf16.mxu0 0
      %370 = vmatmul.mubr.bf16.gmra.mrb[0].mxu0 %v274
      %v371 = vpop.f32.mrb[0].mxu0
      %v372 = vadd.f32 %v255, %v371
      %v373 = vpop.f32.mrb[0].mxu0
      %v374 = vpop.f32.mrb[0].mxu0
      %v375 = vadd.f32 %v255, %v374
      %v376 = vpop.f32.mrb[0].mxu0
      %377 = vmatprep.mubr.bf16.mxu0 0
      %378 = vmatmul.mubr.bf16.gmra.mrb[0].mxu0 %v275
      %v379 = vpop.f32.mrb[0].mxu0
      %v380 = vadd.f32 %v255, %v379
      %v381 = vpop.f32.mrb[0].mxu0
      %v382 = vpop.f32.mrb[0].mxu0
      %v383 = vadd.f32 %v255, %v382
      %v384 = vpop.f32.mrb[0].mxu0
      %385 = vmatprep.mubr.bf16.mxu0 0
      %386 = vmatmul.mubr.bf16.gmra.mrb[0].mxu0 %v276
      %v387 = vpop.f32.mrb[0].mxu0
      %v388 = vadd.f32 %v255, %v387
      %v389 = vpop.f32.mrb[0].mxu0
      %v390 = vpop.f32.mrb[0].mxu0
      %v391 = vadd.f32 %v255, %v390
      %v392 = vpop.f32.mrb[0].mxu0
      %393 = vdwg.mxu0
      %v394 = vmax.f32 %v364, 0.0
      %v395 = vmax.f32 %v367, 0.0
      %v396 = vmax.f32 %v372, 0.0
      %v397 = vmax.f32 %v375, 0.0
      %v398 = vmax.f32 %v380, 0.0
      %v399 = vmax.f32 %v383, 0.0
      %v400 = vmax.f32 %v388, 0.0
      %v401 = vmax.f32 %v391, 0.0
      %v402 = vpack.c.bf16 %v395, %v394
      %v403 = vpack.c.bf16 %v397, %v396
      %v404 = vpack.c.bf16 %v399, %v398
      %v405 = vpack.c.bf16 %v401, %v400
      %v410 = vunpack.c.l.b16 %v402
      %v411 = vunpack.c.h.b16 %v402
      %v412 = vunpack.c.l.b16 %v403
      %v413 = vunpack.c.h.b16 %v403
      %v414 = vunpack.c.l.b16 %v404
      %v415 = vunpack.c.h.b16 %v404
      %v416 = vunpack.c.l.b16 %v405
      %v417 = vunpack.c.h.b16 %v405
      %v418 = vpack.c.b16 %v410, %v410
      %v419 = vpack.c.b16 %v411, %v411
      %v420 = vpack.c.b16 %v412, %v412
      %v421 = vpack.c.b16 %v413, %v413
      %v422 = vpack.c.b16 %v414, %v414
      %v423 = vpack.c.b16 %v415, %v415
      %v424 = vpack.c.b16 %v416, %v416
      %v425 = vpack.c.b16 %v417, %v417
      %434 = vst [vmem:[%s223] sm:$0xf] %v418
      %435 = vst [vmem:[%s223 + $0x4] sm:$0xf] %v419
      %436 = vst [vmem:[%s223 + $0x8] sm:$0xf] %v420
      %437 = vst [vmem:[%s223 + $0xc] sm:$0xf] %v421
      %438 = vst [vmem:[%s223 + $0x10] sm:$0xf] %v422
      %439 = vst [vmem:[%s223 + $0x14] sm:$0xf] %v423
      %440 = vst [vmem:[%s223 + $0x18] sm:$0xf] %v424
      %441 = vst [vmem:[%s223 + $0x1c] sm:$0xf] %v425
      %s442 = smul.u32 8, %s18
      %p443 = scmp.lt.s32.totalorder %s442, 15
      %s444 = scalar_select %p443, %s442, 15
      %p445 = scmp.lt.s32.totalorder %s19, 0
      %s446 = scalar_select %p445, %s19, 0
      %s447 = sadd.s32 %s446, %s444
      %s448 = smul.addr %s447, 4
      %s449 = scalar_lea.vmem %s3, %s448
      // Predicated region
      $region33: #{vae_forward.5} parent=31 // pred_check
        %p450 = pneg %p124
      $region34: #{vae_forward.5} parent=31 // pred_check_branch
        %452 = sbr.rel (%p450) target = $region36
      $region35: #{vae_forward.5} parent=31 // pred_region
        %s453 = smul.u32 8, %s18
      $region36: #{vae_forward.5} parent=31 // pred_fallthru
        _
    $region32: #{vae_forward.5} parent=5 // pred_fallthru
      _
    %p454 = scmp.le.s32.totalorder 2, %s9
    // Predicated region
    $region37: #{vae_forward.5} parent=5 // pred_check
      %p455 = pneg %p454
    $region38: #{vae_forward.5} parent=5 // pred_check_branch
      %457 = sbr.rel (%p455) target = $region40
    $region39: #{vae_forward.5} parent=5 // pred_region
      %s458 = ssub.s32 %s9, 2
      // Predicated region
      $region41: #{vae_forward.5} parent=39 // pred_check
        %p459 = pneg %p130
      $region42: #{vae_forward.5} parent=39 // pred_check_branch
        %461 = sbr.rel (%p459) target = $region44
      $region43: #{vae_forward.5} parent=39 // pred_region
        %s462 = smul.u32 8, %s20
        %p463 = scmp.lt.s32.totalorder %s462, 15
        %s464 = scalar_select %p463, %s462, 15
        %p465 = scmp.lt.s32.totalorder %s21, 0
        %s466 = scalar_select %p465, %s21, 0
        %s467 = sadd.s32 %s466, %s464
        %s468 = smul.addr %s467, 4
        %s469 = scalar_lea.vmem %s3, %s468
      $region44: #{vae_forward.5} parent=39 // pred_fallthru
        _
    $region40: #{vae_forward.5} parent=5 // pred_fallthru
      _
  $region6: #{vae_forward.5} parent=0 // loop_footer
    %s13 = sadd.s32 1, %s9
  $region7: #{vae_forward.5} parent=0 // loop_footer_branch
    %8 = sbr.rel target = $region3
  $region8: #{vae_forward.5} parent=0 // loop_exit
    _

// kernel: vae_forward.6
$region0: #{vae_forward.6}
  #allocation0 [shape = 'u32[]', space=smem, size = 0x4, offset = 0x4, fixed_abs, tag = 'smem constant byte address 0x4 - core index']
  #allocation1 [shape = 'u32[144,128]{1,0:T(1,128)}', space=vmem, size = 0x12000, scoped, tag = 'internal scratch']
  %s0 = inlined_call_operand.vmem [shape: bf16[32,128], index: 0, kind: input, shape index: {}]
  %s1 = inlined_call_operand.vmem [shape: bf16[128,128], index: 1, kind: input, shape index: {}]
  %s2 = inlined_call_operand.vmem [shape: f32[1,128], index: 2, kind: input, shape index: {}]
  %s3 = inlined_call_operand.vmem [shape: bf16[32,128], index: 3, kind: output, shape index: {}]
  %s4 = sld [smem:[#allocation0]]
  $region22: #{vae_forward.6} parent=0
    _
  %s6 = ssub.s32 1, %s4
  %s7 = scalar_select 0, %s6, %s4
  // Predicated region
  $region2: #{vae_forward.6} parent=0 // pred_check
    _
  $region3: #{vae_forward.6} parent=0 // pred_check_branch
    %9 = sbr.rel (0) target = $region5
  $region4: #{vae_forward.6} parent=0 // pred_region
    _
  $region5: #{vae_forward.6} parent=0 // pred_fallthru
    _
  // Predicated region
  $region6: #{vae_forward.6} parent=0 // pred_check
    _
  $region7: #{vae_forward.6} parent=0 // pred_check_branch
    %11 = sbr.rel (0) target = $region9
  $region8: #{vae_forward.6} parent=0 // pred_region
    _
  $region9: #{vae_forward.6} parent=0 // pred_fallthru
    _
  // Predicated region
  $region10: #{vae_forward.6} parent=0 // pred_check
    _
  $region11: #{vae_forward.6} parent=0 // pred_check_branch
    %13 = sbr.rel (0) target = $region13
  $region12: #{vae_forward.6} parent=0 // pred_region
    _
  $region13: #{vae_forward.6} parent=0 // pred_fallthru
    _
  %v15 = vld [vmem:[%s0] sm:$0xf]
  %v16 = vld [vmem:[%s0 + $0x4] sm:$0xf]
  %v17 = vld [vmem:[%s0 + $0x8] sm:$0xf]
  %v18 = vld [vmem:[%s0 + $0xc] sm:$0xf]
  %v19 = vld [vmem:[%s1] sm:$0xf]
  %v20 = vld [vmem:[%s1 + $0x4] sm:$0xf]
  %v21 = vld [vmem:[%s1 + $0x8] sm:$0xf]
  %v22 = vld [vmem:[%s1 + $0xc] sm:$0xf]
  %v23 = vld [vmem:[%s1 + $0x10] sm:$0xf]
  %v24 = vld [vmem:[%s1 + $0x14] sm:$0xf]
  %v25 = vld [vmem:[%s1 + $0x18] sm:$0xf]
  %v26 = vld [vmem:[%s1 + $0x1c] sm:$0xf]
  %v27 = vld [vmem:[%s1 + $0x20] sm:$0xf]
  %v28 = vld [vmem:[%s1 + $0x24] sm:$0xf]
  %v29 = vld [vmem:[%s1 + $0x28] sm:$0xf]
  %v30 = vld [vmem:[%s1 + $0x2c] sm:$0xf]
  %v31 = vld [vmem:[%s1 + $0x30] sm:$0xf]
  %v32 = vld [vmem:[%s1 + $0x34] sm:$0xf]
  %v33 = vld [vmem:[%s1 + $0x38] sm:$0xf]
  %v34 = vld [vmem:[%s1 + $0x3c] sm:$0xf]
  %v35 = vld [vmem:[%s2] sm:$0x1]
  %v37 = vlaneseq
  %v38 = vshrl.u32 %v37, 7
  %v39 = vsub.s32 0, %v38
  %v40 = vrot.slane %v35, %v39
  %v46 = vunpack.c.l.b16 %v15
  %v47 = vunpack.c.l.b16 %v16
  %v48 = vunpack.c.l.b16 %v17
  %v49 = vunpack.c.l.b16 %v18
  %v50 = vpack.c.b16 %v47, %v46
  %v51 = vpack.c.b16 %v49, %v48
  %v70 = vunpack.c.l.b16 %v19
  %v71 = vunpack.c.l.b16 %v20
  %v72 = vunpack.c.l.b16 %v21
  %v73 = vunpack.c.l.b16 %v22
  %v74 = vunpack.c.l.b16 %v23
  %v75 = vunpack.c.l.b16 %v24
  %v76 = vunpack.c.l.b16 %v25
  %v77 = vunpack.c.l.b16 %v26
  %v78 = vunpack.c.l.b16 %v27
  %v79 = vunpack.c.l.b16 %v28
  %v80 = vunpack.c.l.b16 %v29
  %v81 = vunpack.c.l.b16 %v30
  %v82 = vunpack.c.l.b16 %v31
  %v83 = vunpack.c.l.b16 %v32
  %v84 = vunpack.c.l.b16 %v33
  %v85 = vunpack.c.l.b16 %v34
  %v86 = vpack.c.b16 %v71, %v70
  %v87 = vpack.c.b16 %v73, %v72
  %v88 = vpack.c.b16 %v75, %v74
  %v89 = vpack.c.b16 %v77, %v76
  %v90 = vpack.c.b16 %v79, %v78
  %v91 = vpack.c.b16 %v81, %v80
  %v92 = vpack.c.b16 %v83, %v82
  %v93 = vpack.c.b16 %v85, %v84
  %102 = vmatprep.subr.bf16.mxu0 0
  %103 = vmatpush1.bf16.msra.mxu0 %v86
  %104 = vmatprep.subr.bf16.mxu0 0
  %105 = vmatpush1.bf16.msra.mxu0 %v87
  %106 = vmatprep.subr.bf16.mxu0 0
  %107 = vmatpush1.bf16.msra.mxu0 %v88
  %108 = vmatprep.subr.bf16.mxu0 0
  %109 = vmatpush1.bf16.msra.mxu0 %v89
  %110 = vmatprep.subr.bf16.mxu0 0
  %111 = vmatpush1.bf16.msra.mxu0 %v90
  %112 = vmatprep.subr.bf16.mxu0 0
  %113 = vmatpush1.bf16.msra.mxu0 %v91
  %114 = vmatprep.subr.bf16.mxu0 0
  %115 = vmatpush1.bf16.msra.mxu0 %v92
  %116 = vmatprep.subr.bf16.mxu0 0
  %117 = vmatpush1.bf16.msra.mxu0 %v93
  %118 = vmatprep.subr.bf16.mxu0 0
  %119 = vmatpush1.bf16.msra.mxu0 0
  %120 = vmatprep.subr.bf16.mxu0 0
  %121 = vmatpush1.bf16.msra.mxu0 0
  %122 = vmatprep.subr.bf16.mxu0 0
  %123 = vmatpush1.bf16.msra.mxu0 0
  %124 = vmatprep.subr.bf16.mxu0 0
  %125 = vmatpush1.bf16.msra.mxu0 0
  %126 = vmatprep.subr.bf16.mxu0 0
  %127 = vmatpush1.bf16.msra.mxu0 0
  %128 = vmatprep.subr.bf16.mxu0 0
  %129 = vmatpush1.bf16.msra.mxu0 0
  %130 = vmatprep.subr.bf16.mxu0 0
  %131 = vmatpush1.bf16.msra.mxu0 0
  %132 = vmatprep.subr.bf16.mxu0 0
  %133 = vmatpush1.bf16.msra.mxu0 0
  %134 = vmatprep.mubr.bf16.mxu0 0
  %135 = vmatmul.mubr.bf16.gmra.mrb[0].mxu0 %v50
  %v136 = vpop.f32.mrb[0].mxu0
  %v137 = vadd.f32 %v40, %v136
  %v138 = vpop.f32.mrb[0].mxu0
  %v139 = vpop.f32.mrb[0].mxu0
  %v140 = vadd.f32 %v40, %v139
  %v141 = vpop.f32.mrb[0].mxu0
  %142 = vmatprep.mubr.bf16.mxu0 0
  %143 = vmatmul.mubr.bf16.gmra.mrb[0].mxu0 %v51
  %v144 = vpop.f32.mrb[0].mxu0
  %v145 = vadd.f32 %v40, %v144
  %v146 = vpop.f32.mrb[0].mxu0
  %v147 = vpop.f32.mrb[0].mxu0
  %v148 = vadd.f32 %v40, %v147
  %v149 = vpop.f32.mrb[0].mxu0
  %150 = vdwg.mxu0
  %v151 = vmax.f32 %v137, 0.0
  %v152 = vmax.f32 %v140, 0.0
  %v153 = vmax.f32 %v145, 0.0
  %v154 = vmax.f32 %v148, 0.0
  %v155 = vpack.c.bf16 %v152, %v151
  %v156 = vpack.c.bf16 %v154, %v153
  %v159 = vunpack.c.l.b16 %v155
  %v160 = vunpack.c.h.b16 %v155
  %v161 = vunpack.c.l.b16 %v156
  %v162 = vunpack.c.h.b16 %v156
  %v163 = vpack.c.b16 %v159, %v159
  %v164 = vpack.c.b16 %v160, %v160
  %v165 = vpack.c.b16 %v161, %v161
  %v166 = vpack.c.b16 %v162, %v162
  %171 = vst [vmem:[%s3] sm:$0xf] %v163
  %172 = vst [vmem:[%s3 + $0x4] sm:$0xf] %v164
  %173 = vst [vmem:[%s3 + $0x8] sm:$0xf] %v165
  %174 = vst [vmem:[%s3 + $0xc] sm:$0xf] %v166
  // Predicated region
  $region14: #{vae_forward.6} parent=0 // pred_check
    _
  $region15: #{vae_forward.6} parent=0 // pred_check_branch
    %176 = sbr.rel (0) target = $region17
  $region16: #{vae_forward.6} parent=0 // pred_region
    _
  $region17: #{vae_forward.6} parent=0 // pred_fallthru
    _
  // Predicated region
  $region18: #{vae_forward.6} parent=0 // pred_check
    _
  $region19: #{vae_forward.6} parent=0 // pred_check_branch
    %178 = sbr.rel (0) target = $region21
  $region20: #{vae_forward.6} parent=0 // pred_region
    _
  $region21: #{vae_forward.6} parent=0 // pred_fallthru
    _

// kernel: vae_forward.7
$region0: #{vae_forward.7}
  #allocation0 [shape = 'u32[]', space=smem, size = 0x4, offset = 0x4, fixed_abs, tag = 'smem constant byte address 0x4 - core index']
  #allocation1 [shape = 'u32[144,128]{1,0:T(1,128)}', space=vmem, size = 0x12000, scoped, tag = 'internal scratch']
  %s0 = inlined_call_operand.vmem [shape: bf16[8,256], index: 0, kind: input, shape index: {}]
  %s1 = inlined_call_operand.vmem [shape: f32[8,128], index: 1, kind: input, shape index: {}]
  %s2 = inlined_call_operand.vmem [shape: bf16[256,256], index: 2, kind: input, shape index: {}]
  %s3 = inlined_call_operand.vmem [shape: f32[1,256], index: 3, kind: input, shape index: {}]
  %s4 = inlined_call_operand.vmem [shape: bf16[128,256], index: 4, kind: input, shape index: {}]
  %s5 = inlined_call_operand.vmem [shape: f32[1,256], index: 5, kind: input, shape index: {}]
  %s6 = inlined_call_operand.vmem [shape: f32[8,128], index: 6, kind: output, shape index: {0}]
  %s7 = inlined_call_operand.vmem [shape: f32[8,128], index: 7, kind: output, shape index: {1}]
  %s8 = inlined_call_operand.vmem [shape: f32[8,128], index: 8, kind: output, shape index: {2}]
  %s9 = inlined_call_operand.hbm [shape: f32[1,1], index: 9, kind: output, shape index: {3}]
  %s10 = inlined_call_operand.vmem [shape: bf16[8,256], index: 10, kind: output, shape index: {4}]
  %11 = xla_tuple %s6, %s7, %s8, %s9, %s10
  %s12 = sld [smem:[#allocation0]]
  $region66: #{vae_forward.7} parent=0
    _
  %s14 = ssub.s32 1, %s12
  %s15 = scalar_select 0, %s14, %s12
  $region1: #{vae_forward.7} parent=0
    #allocation2 [shape = 'u8[512]{0}', space=vmem, size = 0x400, scoped, tag = 'output window, operand 3, single buffered']
    #allocation3 [shape = 's32[1]{0}', space=sflag, size = 0x4, scoped, tag = 'scoped memory for vae_forward.7']
    %16 = vsyncpa [#allocation3], 0
    // Predicated region
    $region2: #{vae_forward.7} parent=1 // pred_check
      _
    $region3: #{vae_forward.7} parent=1 // pred_check_branch
      %18 = sbr.rel (0) target = $region5
    $region4: #{vae_forward.7} parent=1 // pred_region
      _
    $region5: #{vae_forward.7} parent=1 // pred_fallthru
      _
    // Predicated region
    $region6: #{vae_forward.7} parent=1 // pred_check
      _
    $region7: #{vae_forward.7} parent=1 // pred_check_branch
      %20 = sbr.rel (0) target = $region9
    $region8: #{vae_forward.7} parent=1 // pred_region
      _
    $region9: #{vae_forward.7} parent=1 // pred_fallthru
      _
    // Predicated region
    $region10: #{vae_forward.7} parent=1 // pred_check
      _
    $region11: #{vae_forward.7} parent=1 // pred_check_branch
      %22 = sbr.rel (0) target = $region13
    $region12: #{vae_forward.7} parent=1 // pred_region
      _
    $region13: #{vae_forward.7} parent=1 // pred_fallthru
      _
    // Predicated region
    $region14: #{vae_forward.7} parent=1 // pred_check
      _
    $region15: #{vae_forward.7} parent=1 // pred_check_branch
      %24 = sbr.rel (0) target = $region17
    $region16: #{vae_forward.7} parent=1 // pred_region
      _
    $region17: #{vae_forward.7} parent=1 // pred_fallthru
      _
    // Predicated region
    $region18: #{vae_forward.7} parent=1 // pred_check
      _
    $region19: #{vae_forward.7} parent=1 // pred_check_branch
      %26 = sbr.rel (0) target = $region21
    $region20: #{vae_forward.7} parent=1 // pred_region
      _
    $region21: #{vae_forward.7} parent=1 // pred_fallthru
      _
    // Predicated region
    $region22: #{vae_forward.7} parent=1 // pred_check
      _
    $region23: #{vae_forward.7} parent=1 // pred_check_branch
      %28 = sbr.rel (0) target = $region25
    $region24: #{vae_forward.7} parent=1 // pred_region
      _
    $region25: #{vae_forward.7} parent=1 // pred_fallthru
      _
    %v30 = vld [vmem:[%s0] sm:$0xff]
    %v31 = vld [vmem:[%s2] sm:$0xff]
    %v32 = vld [vmem:[%s2 + $0x8] sm:$0xff]
    %v33 = vld [vmem:[%s2 + $0x10] sm:$0xff]
    %v34 = vld [vmem:[%s2 + $0x18] sm:$0xff]
    %v35 = vld [vmem:[%s2 + $0x20] sm:$0xff]
    %v36 = vld [vmem:[%s2 + $0x28] sm:$0xff]
    %v37 = vld [vmem:[%s2 + $0x30] sm:$0xff]
    %v38 = vld [vmem:[%s2 + $0x38] sm:$0xff]
    %v39 = vld [vmem:[%s2 + $0x40] sm:$0xff]
    %v40 = vld [vmem:[%s2 + $0x48] sm:$0xff]
    %v41 = vld [vmem:[%s2 + $0x50] sm:$0xff]
    %v42 = vld [vmem:[%s2 + $0x58] sm:$0xff]
    %v43 = vld [vmem:[%s2 + $0x60] sm:$0xff]
    %v44 = vld [vmem:[%s2 + $0x68] sm:$0xff]
    %v45 = vld [vmem:[%s2 + $0x70] sm:$0xff]
    %v46 = vld [vmem:[%s2 + $0x78] sm:$0xff]
    %v47 = vld [vmem:[%s2 + $0x80] sm:$0xff]
    %v48 = vld [vmem:[%s2 + $0x88] sm:$0xff]
    %v49 = vld [vmem:[%s2 + $0x90] sm:$0xff]
    %v50 = vld [vmem:[%s2 + $0x98] sm:$0xff]
    %v51 = vld [vmem:[%s2 + $0xa0] sm:$0xff]
    %v52 = vld [vmem:[%s2 + $0xa8] sm:$0xff]
    %v53 = vld [vmem:[%s2 + $0xb0] sm:$0xff]
    %v54 = vld [vmem:[%s2 + $0xb8] sm:$0xff]
    %v55 = vld [vmem:[%s2 + $0xc0] sm:$0xff]
    %v56 = vld [vmem:[%s2 + $0xc8] sm:$0xff]
    %v57 = vld [vmem:[%s2 + $0xd0] sm:$0xff]
    %v58 = vld [vmem:[%s2 + $0xd8] sm:$0xff]
    %v59 = vld [vmem:[%s2 + $0xe0] sm:$0xff]
    %v60 = vld [vmem:[%s2 + $0xe8] sm:$0xff]
    %v61 = vld [vmem:[%s2 + $0xf0] sm:$0xff]
    %v62 = vld [vmem:[%s2 + $0xf8] sm:$0xff]
    %v63 = vld [vmem:[%s3] sm:$0x3]
    %v65 = vlaneseq
    %v66 = vshrl.u32 %v65, 7
    %v67 = vsub.s32 0, %v66
    %v68 = vrot.slane %v63, %v67
    %v69 = vlaneseq
    %v70 = vshrl.u32 %v69, 7
    %v71 = vsub.s32 1, %v70
    %v72 = vrot.slane %v63, %v71
    %v76 = vunpack.c.l.b16 %v30
    %v77 = vunpack.c.h.b16 %v30
    %v78 = vpack.c.b16 %v76, %v76
    %v79 = vpack.c.b16 %v77, %v77
    %v114 = vunpack.c.l.b16 %v31
    %v115 = vunpack.c.h.b16 %v31
    %v116 = vunpack.c.l.b16 %v32
    %v117 = vunpack.c.h.b16 %v32
    %v118 = vunpack.c.l.b16 %v33
    %v119 = vunpack.c.h.b16 %v33
    %v120 = vunpack.c.l.b16 %v34
    %v121 = vunpack.c.h.b16 %v34
    %v122 = vunpack.c.l.b16 %v35
    %v123 = vunpack.c.h.b16 %v35
    %v124 = vunpack.c.l.b16 %v36
    %v125 = vunpack.c.h.b16 %v36
    %v126 = vunpack.c.l.b16 %v37
    %v127 = vunpack.c.h.b16 %v37
    %v128 = vunpack.c.l.b16 %v38
    %v129 = vunpack.c.h.b16 %v38
    %v130 = vunpack.c.l.b16 %v39
    %v131 = vunpack.c.h.b16 %v39
    %v132 = vunpack.c.l.b16 %v40
    %v133 = vunpack.c.h.b16 %v40
    %v134 = vunpack.c.l.b16 %v41
    %v135 = vunpack.c.h.b16 %v41
    %v136 = vunpack.c.l.b16 %v42
    %v137 = vunpack.c.h.b16 %v42
    %v138 = vunpack.c.l.b16 %v43
    %v139 = vunpack.c.h.b16 %v43
    %v140 = vunpack.c.l.b16 %v44
    %v141 = vunpack.c.h.b16 %v44
    %v142 = vunpack.c.l.b16 %v45
    %v143 = vunpack.c.h.b16 %v45
    %v144 = vunpack.c.l.b16 %v46
    %v145 = vunpack.c.h.b16 %v46
    %v146 = vunpack.c.l.b16 %v47
    %v147 = vunpack.c.h.b16 %v47
    %v148 = vunpack.c.l.b16 %v48
    %v149 = vunpack.c.h.b16 %v48
    %v150 = vunpack.c.l.b16 %v49
    %v151 = vunpack.c.h.b16 %v49
    %v152 = vunpack.c.l.b16 %v50
    %v153 = vunpack.c.h.b16 %v50
    %v154 = vunpack.c.l.b16 %v51
    %v155 = vunpack.c.h.b16 %v51
    %v156 = vunpack.c.l.b16 %v52
    %v157 = vunpack.c.h.b16 %v52
    %v158 = vunpack.c.l.b16 %v53
    %v159 = vunpack.c.h.b16 %v53
    %v160 = vunpack.c.l.b16 %v54
    %v161 = vunpack.c.h.b16 %v54
    %v162 = vunpack.c.l.b16 %v55
    %v163 = vunpack.c.h.b16 %v55
    %v164 = vunpack.c.l.b16 %v56
    %v165 = vunpack.c.h.b16 %v56
    %v166 = vunpack.c.l.b16 %v57
    %v167 = vunpack.c.h.b16 %v57
    %v168 = vunpack.c.l.b16 %v58
    %v169 = vunpack.c.h.b16 %v58
    %v170 = vunpack.c.l.b16 %v59
    %v171 = vunpack.c.h.b16 %v59
    %v172 = vunpack.c.l.b16 %v60
    %v173 = vunpack.c.h.b16 %v60
    %v174 = vunpack.c.l.b16 %v61
    %v175 = vunpack.c.h.b16 %v61
    %v176 = vunpack.c.l.b16 %v62
    %v177 = vunpack.c.h.b16 %v62
    %v178 = vpack.c.b16 %v116, %v114
    %v179 = vpack.c.b16 %v117, %v115
    %v180 = vpack.c.b16 %v120, %v118
    %v181 = vpack.c.b16 %v121, %v119
    %v182 = vpack.c.b16 %v124, %v122
    %v183 = vpack.c.b16 %v125, %v123
    %v184 = vpack.c.b16 %v128, %v126
    %v185 = vpack.c.b16 %v129, %v127
    %v186 = vpack.c.b16 %v132, %v130
    %v187 = vpack.c.b16 %v133, %v131
    %v188 = vpack.c.b16 %v136, %v134
    %v189 = vpack.c.b16 %v137, %v135
    %v190 = vpack.c.b16 %v140, %v138
    %v191 = vpack.c.b16 %v141, %v139
    %v192 = vpack.c.b16 %v144, %v142
    %v193 = vpack.c.b16 %v145, %v143
    %v194 = vpack.c.b16 %v148, %v146
    %v195 = vpack.c.b16 %v149, %v147
    %v196 = vpack.c.b16 %v152, %v150
    %v197 = vpack.c.b16 %v153, %v151
    %v198 = vpack.c.b16 %v156, %v154
    %v199 = vpack.c.b16 %v157, %v155
    %v200 = vpack.c.b16 %v160, %v158
    %v201 = vpack.c.b16 %v161, %v159
    %v202 = vpack.c.b16 %v164, %v162
    %v203 = vpack.c.b16 %v165, %v163
    %v204 = vpack.c.b16 %v168, %v166
    %v205 = vpack.c.b16 %v169, %v167
    %v206 = vpack.c.b16 %v172, %v170
    %v207 = vpack.c.b16 %v173, %v171
    %v208 = vpack.c.b16 %v176, %v174
    %v209 = vpack.c.b16 %v177, %v175
    %242 = vmatprep.subr.bf16.mxu0 %v179
    %243 = vmatpush1.bf16.msra.mxu0 %v178
    %244 = vmatprep.subr.bf16.mxu0 %v181
    %245 = vmatpush1.bf16.msra.mxu0 %v180
    %246 = vmatprep.subr.bf16.mxu0 %v183
    %247 = vmatpush1.bf16.msra.mxu0 %v182
    %248 = vmatprep.subr.bf16.mxu0 %v185
    %249 = vmatpush1.bf16.msra.mxu0 %v184
    %250 = vmatprep.subr.bf16.mxu0 %v187
    %251 = vmatpush1.bf16.msra.mxu0 %v186
    %252 = vmatprep.subr.bf16.mxu0 %v189
    %253 = vmatpush1.bf16.msra.mxu0 %v188
    %254 = vmatprep.subr.bf16.mxu0 %v191
    %255 = vmatpush1.bf16.msra.mxu0 %v190
    %256 = vmatprep.subr.bf16.mxu0 %v193
    %257 = vmatpush1.bf16.msra.mxu0 %v192
    %258 = vmatprep.subr.bf16.mxu0 %v195
    %259 = vmatpush1.bf16.msra.mxu0 %v194
    %260 = vmatprep.subr.bf16.mxu0 %v197
    %261 = vmatpush1.bf16.msra.mxu0 %v196
    %262 = vmatprep.subr.bf16.mxu0 %v199
    %263 = vmatpush1.bf16.msra.mxu0 %v198
    %264 = vmatprep.subr.bf16.mxu0 %v201
    %265 = vmatpush1.bf16.msra.mxu0 %v200
    %266 = vmatprep.subr.bf16.mxu0 %v203
    %267 = vmatpush1.bf16.msra.mxu0 %v202
    %268 = vmatprep.subr.bf16.mxu0 %v205
    %269 = vmatpush1.bf16.msra.mxu0 %v204
    %270 = vmatprep.subr.bf16.mxu0 %v207
    %271 = vmatpush1.bf16.msra.mxu0 %v206
    %272 = vmatprep.subr.bf16.mxu0 %v209
    %273 = vmatpush1.bf16.msra.mxu0 %v208
    %274 = vmatprep.mubr.bf16.mxu0 %v79
    %275 = vmatmul.mubr.bf16.gmra.mrb[0].mxu0 %v78
    %v276 = vpop.f32.mrb[0].mxu0
    %v277 = vadd.f32 %v68, %v276
    %v278 = vpop.f32.mrb[0].mxu0
    %v279 = vadd.f32 %v72, %v278
    %v280 = vpop.f32.mrb[0].mxu0
    %v281 = vpop.f32.mrb[0].mxu0
    %282 = vdwg.mxu0
    %v283 = vmul.f32 %v279, 0.5
    %v284 = vmul.f32 %v283, 1.442695
    %v285 = vpow.pop %v284
    %v286 = vld [vmem:[%s1] sm:$0xff]
    %v287 = vmul.f32 %v286, %v285
    %v288 = vadd.f32 %v287, %v277
    %289 = vst [vmem:[%s6] sm:$0xff] %v277
    %290 = vst [vmem:[%s7] sm:$0xff] %v279
    %291 = vst [vmem:[%s8] sm:$0xff] %v288
    %v292 = vlaneseq
    %v293 = vshrl.u32 %v292, 7
    %vm294 = vcmp.lt.s32.totalorder %v293, 2
    %v295 = vsel %vm294, 1, 0
    %v296 = vcvt.s32.f32 %v295
    %v297 = vadd.f32 %v279, 1.0
    %v298 = vmul.f32 %v277, %v277
    %v299 = vsub.f32 %v297, %v298
    %v300 = vmul.f32 %v279, 1.442695
    %v301 = vpow.pop %v300
    %v302 = vsub.f32 %v299, %v301
    %v303 = vmul.f32 %v302, -0.5
    %v304 = vmul.f32 %v303, %v296
    %305 = vadd.xlane.f32.xlu0 %v304
    %v306 = vpop.xlane.xlu0 %305
    %v307 = vrot.slane %v306, 4
    %v308 = vadd.f32 %v306, %v307
    %v309 = vrot.slane %v308, 2
    %v310 = vadd.f32 %v308, %v309
    %v311 = vrot.slane %v310, 1
    %v312 = vadd.f32 %v310, %v311
    %s313 = vtos %v312
    %v314 = vstv %s313
    %vm315 = vcmask 0
    %316 = vst.msk [vmem:[#allocation2] sm:$0x1] %vm315, %v314
    %v317 = vpack.c.bf16 %v288, %v288
    %v318 = vld [vmem:[%s4] sm:$0xff]
    %v319 = vld [vmem:[%s4 + $0x8] sm:$0xff]
    %v320 = vld [vmem:[%s4 + $0x10] sm:$0xff]
    %v321 = vld [vmem:[%s4 + $0x18] sm:$0xff]
    %v322 = vld [vmem:[%s4 + $0x20] sm:$0xff]
    %v323 = vld [vmem:[%s4 + $0x28] sm:$0xff]
    %v324 = vld [vmem:[%s4 + $0x30] sm:$0xff]
    %v325 = vld [vmem:[%s4 + $0x38] sm:$0xff]
    %v326 = vld [vmem:[%s4 + $0x40] sm:$0xff]
    %v327 = vld [vmem:[%s4 + $0x48] sm:$0xff]
    %v328 = vld [vmem:[%s4 + $0x50] sm:$0xff]
    %v329 = vld [vmem:[%s4 + $0x58] sm:$0xff]
    %v330 = vld [vmem:[%s4 + $0x60] sm:$0xff]
    %v331 = vld [vmem:[%s4 + $0x68] sm:$0xff]
    %v332 = vld [vmem:[%s4 + $0x70] sm:$0xff]
    %v333 = vld [vmem:[%s4 + $0x78] sm:$0xff]
    %v334 = vld [vmem:[%s5] sm:$0x3]
    %v336 = vlaneseq
    %v337 = vshrl.u32 %v336, 7
    %v338 = vsub.s32 0, %v337
    %v339 = vrot.slane %v334, %v338
    %v340 = vlaneseq
    %v341 = vshrl.u32 %v340, 7
    %v342 = vsub.s32 1, %v341
    %v343 = vrot.slane %v334, %v342
    %v362 = vunpack.c.l.b16 %v318
    %v363 = vunpack.c.h.b16 %v318
    %v364 = vunpack.c.l.b16 %v319
    %v365 = vunpack.c.h.b16 %v319
    %v366 = vunpack.c.l.b16 %v320
    %v367 = vunpack.c.h.b16 %v320
    %v368 = vunpack.c.l.b16 %v321
    %v369 = vunpack.c.h.b16 %v321
    %v370 = vunpack.c.l.b16 %v322
    %v371 = vunpack.c.h.b16 %v322
    %v372 = vunpack.c.l.b16 %v323
    %v373 = vunpack.c.h.b16 %v323
    %v374 = vunpack.c.l.b16 %v324
    %v375 = vunpack.c.h.b16 %v324
    %v376 = vunpack.c.l.b16 %v325
    %v377 = vunpack.c.h.b16 %v325
    %v378 = vunpack.c.l.b16 %v326
    %v379 = vunpack.c.h.b16 %v326
    %v380 = vunpack.c.l.b16 %v327
    %v381 = vunpack.c.h.b16 %v327
    %v382 = vunpack.c.l.b16 %v328
    %v383 = vunpack.c.h.b16 %v328
    %v384 = vunpack.c.l.b16 %v329
    %v385 = vunpack.c.h.b16 %v329
    %v386 = vunpack.c.l.b16 %v330
    %v387 = vunpack.c.h.b16 %v330
    %v388 = vunpack.c.l.b16 %v331
    %v389 = vunpack.c.h.b16 %v331
    %v390 = vunpack.c.l.b16 %v332
    %v391 = vunpack.c.h.b16 %v332
    %v392 = vunpack.c.l.b16 %v333
    %v393 = vunpack.c.h.b16 %v333
    %v394 = vpack.c.b16 %v364, %v362
    %v395 = vpack.c.b16 %v365, %v363
    %v396 = vpack.c.b16 %v368, %v366
    %v397 = vpack.c.b16 %v369, %v367
    %v398 = vpack.c.b16 %v372, %v370
    %v399 = vpack.c.b16 %v373, %v371
    %v400 = vpack.c.b16 %v376, %v374
    %v401 = vpack.c.b16 %v377, %v375
    %v402 = vpack.c.b16 %v380, %v378
    %v403 = vpack.c.b16 %v381, %v379
    %v404 = vpack.c.b16 %v384, %v382
    %v405 = vpack.c.b16 %v385, %v383
    %v406 = vpack.c.b16 %v388, %v386
    %v407 = vpack.c.b16 %v389, %v387
    %v408 = vpack.c.b16 %v392, %v390
    %v409 = vpack.c.b16 %v393, %v391
    %426 = vmatprep.subr.bf16.mxu0 %v395
    %427 = vmatpush1.bf16.msra.mxu0 %v394
    %428 = vmatprep.subr.bf16.mxu0 %v397
    %429 = vmatpush1.bf16.msra.mxu0 %v396
    %430 = vmatprep.subr.bf16.mxu0 %v399
    %431 = vmatpush1.bf16.msra.mxu0 %v398
    %432 = vmatprep.subr.bf16.mxu0 %v401
    %433 = vmatpush1.bf16.msra.mxu0 %v400
    %434 = vmatprep.subr.bf16.mxu0 %v403
    %435 = vmatpush1.bf16.msra.mxu0 %v402
    %436 = vmatprep.subr.bf16.mxu0 %v405
    %437 = vmatpush1.bf16.msra.mxu0 %v404
    %438 = vmatprep.subr.bf16.mxu0 %v407
    %439 = vmatpush1.bf16.msra.mxu0 %v406
    %440 = vmatprep.subr.bf16.mxu0 %v409
    %441 = vmatpush1.bf16.msra.mxu0 %v408
    %442 = vmatprep.subr.bf16.mxu0 0
    %443 = vmatpush1.bf16.msra.mxu0 0
    %444 = vmatprep.subr.bf16.mxu0 0
    %445 = vmatpush1.bf16.msra.mxu0 0
    %446 = vmatprep.subr.bf16.mxu0 0
    %447 = vmatpush1.bf16.msra.mxu0 0
    %448 = vmatprep.subr.bf16.mxu0 0
    %449 = vmatpush1.bf16.msra.mxu0 0
    %450 = vmatprep.subr.bf16.mxu0 0
    %451 = vmatpush1.bf16.msra.mxu0 0
    %452 = vmatprep.subr.bf16.mxu0 0
    %453 = vmatpush1.bf16.msra.mxu0 0
    %454 = vmatprep.subr.bf16.mxu0 0
    %455 = vmatpush1.bf16.msra.mxu0 0
    %456 = vmatprep.subr.bf16.mxu0 0
    %457 = vmatpush1.bf16.msra.mxu0 0
    %458 = vmatprep.mubr.bf16.mxu0 0
    %459 = vmatmul.mubr.bf16.gmra.mrb[0].mxu0 %v317
    %v460 = vpop.f32.mrb[0].mxu0
    %v461 = vadd.f32 %v339, %v460
    %v462 = vpop.f32.mrb[0].mxu0
    %v463 = vadd.f32 %v343, %v462
    %v464 = vpop.f32.mrb[0].mxu0
    %v465 = vpop.f32.mrb[0].mxu0
    %466 = vdwg.mxu0
    %v467 = vpack.c.bf16 %v461, %v461
    %v468 = vpack.c.bf16 %v463, %v463
    %v471 = vunpack.c.l.b16 %v467
    %v472 = vunpack.c.l.b16 %v468
    %v473 = vpack.c.b16 %v472, %v471
    %475 = vst [vmem:[%s10] sm:$0xff] %v473
    // Predicated region
    $region26: #{vae_forward.7} parent=1 // pred_check
      _
    $region27: #{vae_forward.7} parent=1 // pred_check_branch
      %477 = sbr.rel (0) target = $region29
    $region28: #{vae_forward.7} parent=1 // pred_region
      _
    $region29: #{vae_forward.7} parent=1 // pred_fallthru
      _
    // Predicated region
    $region30: #{vae_forward.7} parent=1 // pred_check
      _
    $region31: #{vae_forward.7} parent=1 // pred_check_branch
      %479 = sbr.rel (0) target = $region33
    $region32: #{vae_forward.7} parent=1 // pred_region
      _
    $region33: #{vae_forward.7} parent=1 // pred_fallthru
      _
    // Predicated region
    $region34: #{vae_forward.7} parent=1 // pred_check
      _
    $region35: #{vae_forward.7} parent=1 // pred_check_branch
      %481 = sbr.rel (0) target = $region37
    $region36: #{vae_forward.7} parent=1 // pred_region
      _
    $region37: #{vae_forward.7} parent=1 // pred_fallthru
      _
    // Predicated region
    $region38: #{vae_forward.7} parent=1 // pred_check
      _
    $region39: #{vae_forward.7} parent=1 // pred_check_branch
      %483 = sbr.rel (0) target = $region41
    $region40: #{vae_forward.7} parent=1 // pred_region
      %s485 = ssub.s32 16, 16
      %486 = vsyncadd [#allocation3], %s485
      %s488 = sshll.u32 [#allocation2], 4
      %s489 = int_to_ptr.vmem [resolvable:$true] %s488
      %491 = dma.vmem_to_hbm [thread:$0]  %s489, 16, %s9, [#allocation3]
    $region41: #{vae_forward.7} parent=1 // pred_fallthru
      _
    // Predicated region
    $region42: #{vae_forward.7} parent=1 // pred_check
      _
    $region43: #{vae_forward.7} parent=1 // pred_check_branch
      %493 = sbr.rel (0) target = $region45
    $region44: #{vae_forward.7} parent=1 // pred_region
      _
    $region45: #{vae_forward.7} parent=1 // pred_fallthru
      _
    // Predicated region
    $region46: #{vae_forward.7} parent=1 // pred_check
      _
    $region47: #{vae_forward.7} parent=1 // pred_check_branch
      %495 = sbr.rel (0) target = $region49
    $region48: #{vae_forward.7} parent=1 // pred_region
      _
    $region49: #{vae_forward.7} parent=1 // pred_fallthru
      _
    // Predicated region
    $region50: #{vae_forward.7} parent=1 // pred_check
      _
    $region51: #{vae_forward.7} parent=1 // pred_check_branch
      %497 = sbr.rel (0) target = $region53
    $region52: #{vae_forward.7} parent=1 // pred_region
      _
    $region53: #{vae_forward.7} parent=1 // pred_fallthru
      _
    // Predicated region
    $region54: #{vae_forward.7} parent=1 // pred_check
      _
    $region55: #{vae_forward.7} parent=1 // pred_check_branch
      %499 = sbr.rel (0) target = $region57
    $region56: #{vae_forward.7} parent=1 // pred_region
      _
    $region57: #{vae_forward.7} parent=1 // pred_fallthru
      _
    // Predicated region
    $region58: #{vae_forward.7} parent=1 // pred_check
      _
    $region59: #{vae_forward.7} parent=1 // pred_check_branch
      %501 = sbr.rel (0) target = $region61
    $region60: #{vae_forward.7} parent=1 // pred_region
      %502 = dma.done [#allocation3], 16
    $region61: #{vae_forward.7} parent=1 // pred_fallthru
      _
    // Predicated region
    $region62: #{vae_forward.7} parent=1 // pred_check
      _
    $region63: #{vae_forward.7} parent=1 // pred_check_branch
      %504 = sbr.rel (0) target = $region65
    $region64: #{vae_forward.7} parent=1 // pred_region
      _
    $region65: #{vae_forward.7} parent=1 // pred_fallthru
      _
    %505 = vsyncpa [#allocation3], 1

// kernel: vae_forward.8
$region0: #{vae_forward.8}
  #allocation0 [shape = 'u32[]', space=smem, size = 0x4, offset = 0x4, fixed_abs, tag = 'smem constant byte address 0x4 - core index']
  #allocation1 [shape = 'u32[144,128]{1,0:T(1,128)}', space=vmem, size = 0x12000, scoped, tag = 'internal scratch']
  %s0 = inlined_call_operand.vmem [shape: bf16[32,256], index: 0, kind: input, shape index: {}]
  %s1 = inlined_call_operand.vmem [shape: bf16[256,128], index: 1, kind: input, shape index: {}]
  %s2 = inlined_call_operand.vmem [shape: f32[1,128], index: 2, kind: input, shape index: {}]
  %s3 = inlined_call_operand.vmem [shape: bf16[32,128], index: 3, kind: output, shape index: {}]
  %s4 = sld [smem:[#allocation0]]
  $region22: #{vae_forward.8} parent=0
    _
  %s6 = ssub.s32 1, %s4
  %s7 = scalar_select 0, %s6, %s4
  // Predicated region
  $region2: #{vae_forward.8} parent=0 // pred_check
    _
  $region3: #{vae_forward.8} parent=0 // pred_check_branch
    %9 = sbr.rel (0) target = $region5
  $region4: #{vae_forward.8} parent=0 // pred_region
    _
  $region5: #{vae_forward.8} parent=0 // pred_fallthru
    _
  // Predicated region
  $region6: #{vae_forward.8} parent=0 // pred_check
    _
  $region7: #{vae_forward.8} parent=0 // pred_check_branch
    %11 = sbr.rel (0) target = $region9
  $region8: #{vae_forward.8} parent=0 // pred_region
    _
  $region9: #{vae_forward.8} parent=0 // pred_fallthru
    _
  // Predicated region
  $region10: #{vae_forward.8} parent=0 // pred_check
    _
  $region11: #{vae_forward.8} parent=0 // pred_check_branch
    %13 = sbr.rel (0) target = $region13
  $region12: #{vae_forward.8} parent=0 // pred_region
    _
  $region13: #{vae_forward.8} parent=0 // pred_fallthru
    _
  %v15 = vld [vmem:[%s0] sm:$0xff]
  %v16 = vld [vmem:[%s0 + $0x8] sm:$0xff]
  %v17 = vld [vmem:[%s0 + $0x10] sm:$0xff]
  %v18 = vld [vmem:[%s0 + $0x18] sm:$0xff]
  %v19 = vld [vmem:[%s1] sm:$0xf]
  %v20 = vld [vmem:[%s1 + $0x4] sm:$0xf]
  %v21 = vld [vmem:[%s1 + $0x8] sm:$0xf]
  %v22 = vld [vmem:[%s1 + $0xc] sm:$0xf]
  %v23 = vld [vmem:[%s1 + $0x10] sm:$0xf]
  %v24 = vld [vmem:[%s1 + $0x14] sm:$0xf]
  %v25 = vld [vmem:[%s1 + $0x18] sm:$0xf]
  %v26 = vld [vmem:[%s1 + $0x1c] sm:$0xf]
  %v27 = vld [vmem:[%s1 + $0x20] sm:$0xf]
  %v28 = vld [vmem:[%s1 + $0x24] sm:$0xf]
  %v29 = vld [vmem:[%s1 + $0x28] sm:$0xf]
  %v30 = vld [vmem:[%s1 + $0x2c] sm:$0xf]
  %v31 = vld [vmem:[%s1 + $0x30] sm:$0xf]
  %v32 = vld [vmem:[%s1 + $0x34] sm:$0xf]
  %v33 = vld [vmem:[%s1 + $0x38] sm:$0xf]
  %v34 = vld [vmem:[%s1 + $0x3c] sm:$0xf]
  %v35 = vld [vmem:[%s1 + $0x40] sm:$0xf]
  %v36 = vld [vmem:[%s1 + $0x44] sm:$0xf]
  %v37 = vld [vmem:[%s1 + $0x48] sm:$0xf]
  %v38 = vld [vmem:[%s1 + $0x4c] sm:$0xf]
  %v39 = vld [vmem:[%s1 + $0x50] sm:$0xf]
  %v40 = vld [vmem:[%s1 + $0x54] sm:$0xf]
  %v41 = vld [vmem:[%s1 + $0x58] sm:$0xf]
  %v42 = vld [vmem:[%s1 + $0x5c] sm:$0xf]
  %v43 = vld [vmem:[%s1 + $0x60] sm:$0xf]
  %v44 = vld [vmem:[%s1 + $0x64] sm:$0xf]
  %v45 = vld [vmem:[%s1 + $0x68] sm:$0xf]
  %v46 = vld [vmem:[%s1 + $0x6c] sm:$0xf]
  %v47 = vld [vmem:[%s1 + $0x70] sm:$0xf]
  %v48 = vld [vmem:[%s1 + $0x74] sm:$0xf]
  %v49 = vld [vmem:[%s1 + $0x78] sm:$0xf]
  %v50 = vld [vmem:[%s1 + $0x7c] sm:$0xf]
  %v51 = vld [vmem:[%s2] sm:$0x1]
  %v53 = vlaneseq
  %v54 = vshrl.u32 %v53, 7
  %v55 = vsub.s32 0, %v54
  %v56 = vrot.slane %v51, %v55
  %v62 = vunpack.c.l.b16 %v15
  %v63 = vunpack.c.h.b16 %v15
  %v64 = vunpack.c.l.b16 %v16
  %v65 = vunpack.c.h.b16 %v16
  %v66 = vunpack.c.l.b16 %v17
  %v67 = vunpack.c.h.b16 %v17
  %v68 = vunpack.c.l.b16 %v18
  %v69 = vunpack.c.h.b16 %v18
  %v70 = vpack.c.b16 %v64, %v62
  %v71 = vpack.c.b16 %v65, %v63
  %v72 = vpack.c.b16 %v68, %v66
  %v73 = vpack.c.b16 %v69, %v67
  %v110 = vunpack.c.l.b16 %v19
  %v111 = vunpack.c.l.b16 %v20
  %v112 = vunpack.c.l.b16 %v21
  %v113 = vunpack.c.l.b16 %v22
  %v114 = vunpack.c.l.b16 %v23
  %v115 = vunpack.c.l.b16 %v24
  %v116 = vunpack.c.l.b16 %v25
  %v117 = vunpack.c.l.b16 %v26
  %v118 = vunpack.c.l.b16 %v27
  %v119 = vunpack.c.l.b16 %v28
  %v120 = vunpack.c.l.b16 %v29
  %v121 = vunpack.c.l.b16 %v30
  %v122 = vunpack.c.l.b16 %v31
  %v123 = vunpack.c.l.b16 %v32
  %v124 = vunpack.c.l.b16 %v33
  %v125 = vunpack.c.l.b16 %v34
  %v126 = vunpack.c.l.b16 %v35
  %v127 = vunpack.c.l.b16 %v36
  %v128 = vunpack.c.l.b16 %v37
  %v129 = vunpack.c.l.b16 %v38
  %v130 = vunpack.c.l.b16 %v39
  %v131 = vunpack.c.l.b16 %v40
  %v132 = vunpack.c.l.b16 %v41
  %v133 = vunpack.c.l.b16 %v42
  %v134 = vunpack.c.l.b16 %v43
  %v135 = vunpack.c.l.b16 %v44
  %v136 = vunpack.c.l.b16 %v45
  %v137 = vunpack.c.l.b16 %v46
  %v138 = vunpack.c.l.b16 %v47
  %v139 = vunpack.c.l.b16 %v48
  %v140 = vunpack.c.l.b16 %v49
  %v141 = vunpack.c.l.b16 %v50
  %v142 = vpack.c.b16 %v111, %v110
  %v143 = vpack.c.b16 %v113, %v112
  %v144 = vpack.c.b16 %v115, %v114
  %v145 = vpack.c.b16 %v117, %v116
  %v146 = vpack.c.b16 %v119, %v118
  %v147 = vpack.c.b16 %v121, %v120
  %v148 = vpack.c.b16 %v123, %v122
  %v149 = vpack.c.b16 %v125, %v124
  %v150 = vpack.c.b16 %v127, %v126
  %v151 = vpack.c.b16 %v129, %v128
  %v152 = vpack.c.b16 %v131, %v130
  %v153 = vpack.c.b16 %v133, %v132
  %v154 = vpack.c.b16 %v135, %v134
  %v155 = vpack.c.b16 %v137, %v136
  %v156 = vpack.c.b16 %v139, %v138
  %v157 = vpack.c.b16 %v141, %v140
  %174 = vmatprep.subr.bf16.mxu0 0
  %175 = vmatpush1.bf16.msra.mxu0 %v142
  %176 = vmatprep.subr.bf16.mxu0 0
  %177 = vmatpush1.bf16.msra.mxu0 %v143
  %178 = vmatprep.subr.bf16.mxu0 0
  %179 = vmatpush1.bf16.msra.mxu0 %v144
  %180 = vmatprep.subr.bf16.mxu0 0
  %181 = vmatpush1.bf16.msra.mxu0 %v145
  %182 = vmatprep.subr.bf16.mxu0 0
  %183 = vmatpush1.bf16.msra.mxu0 %v146
  %184 = vmatprep.subr.bf16.mxu0 0
  %185 = vmatpush1.bf16.msra.mxu0 %v147
  %186 = vmatprep.subr.bf16.mxu0 0
  %187 = vmatpush1.bf16.msra.mxu0 %v148
  %188 = vmatprep.subr.bf16.mxu0 0
  %189 = vmatpush1.bf16.msra.mxu0 %v149
  %190 = vmatprep.subr.bf16.mxu0 0
  %191 = vmatpush1.bf16.msra.mxu0 %v150
  %192 = vmatprep.subr.bf16.mxu0 0
  %193 = vmatpush1.bf16.msra.mxu0 %v151
  %194 = vmatprep.subr.bf16.mxu0 0
  %195 = vmatpush1.bf16.msra.mxu0 %v152
  %196 = vmatprep.subr.bf16.mxu0 0
  %197 = vmatpush1.bf16.msra.mxu0 %v153
  %198 = vmatprep.subr.bf16.mxu0 0
  %199 = vmatpush1.bf16.msra.mxu0 %v154
  %200 = vmatprep.subr.bf16.mxu0 0
  %201 = vmatpush1.bf16.msra.mxu0 %v155
  %202 = vmatprep.subr.bf16.mxu0 0
  %203 = vmatpush1.bf16.msra.mxu0 %v156
  %204 = vmatprep.subr.bf16.mxu0 0
  %205 = vmatpush1.bf16.msra.mxu0 %v157
  %206 = vmatprep.mubr.bf16.mxu0 %v71
  %207 = vmatmul.mubr.bf16.gmra.mrb[0].mxu0 %v70
  %v208 = vpop.f32.mrb[0].mxu0
  %v209 = vadd.f32 %v56, %v208
  %v210 = vpop.f32.mrb[0].mxu0
  %v211 = vpop.f32.mrb[0].mxu0
  %v212 = vadd.f32 %v56, %v211
  %v213 = vpop.f32.mrb[0].mxu0
  %214 = vmatprep.mubr.bf16.mxu0 %v73
  %215 = vmatmul.mubr.bf16.gmra.mrb[0].mxu0 %v72
  %v216 = vpop.f32.mrb[0].mxu0
  %v217 = vadd.f32 %v56, %v216
  %v218 = vpop.f32.mrb[0].mxu0
  %v219 = vpop.f32.mrb[0].mxu0
  %v220 = vadd.f32 %v56, %v219
  %v221 = vpop.f32.mrb[0].mxu0
  %222 = vdwg.mxu0
  %v223 = vmax.f32 %v209, 0.0
  %v224 = vmax.f32 %v212, 0.0
  %v225 = vmax.f32 %v217, 0.0
  %v226 = vmax.f32 %v220, 0.0
  %v227 = vpack.c.bf16 %v224, %v223
  %v228 = vpack.c.bf16 %v226, %v225
  %v231 = vunpack.c.l.b16 %v227
  %v232 = vunpack.c.h.b16 %v227
  %v233 = vunpack.c.l.b16 %v228
  %v234 = vunpack.c.h.b16 %v228
  %v235 = vpack.c.b16 %v231, %v231
  %v236 = vpack.c.b16 %v232, %v232
  %v237 = vpack.c.b16 %v233, %v233
  %v238 = vpack.c.b16 %v234, %v234
  %243 = vst [vmem:[%s3] sm:$0xf] %v235
  %244 = vst [vmem:[%s3 + $0x4] sm:$0xf] %v236
  %245 = vst [vmem:[%s3 + $0x8] sm:$0xf] %v237
  %246 = vst [vmem:[%s3 + $0xc] sm:$0xf] %v238
  // Predicated region
  $region14: #{vae_forward.8} parent=0 // pred_check
    _
  $region15: #{vae_forward.8} parent=0 // pred_check_branch
    %248 = sbr.rel (0) target = $region17
  $region16: #{vae_forward.8} parent=0 // pred_region
    _
  $region17: #{vae_forward.8} parent=0 // pred_fallthru
    _
  // Predicated region
  $region18: #{vae_forward.8} parent=0 // pred_check
    _
  $region19: #{vae_forward.8} parent=0 // pred_check_branch
    %250 = sbr.rel (0) target = $region21
  $region20: #{vae_forward.8} parent=0 // pred_region
    _
  $region21: #{vae_forward.8} parent=0 // pred_fallthru
    _

// kernel: vae_forward.9
$region0: #{vae_forward.9}
  #allocation0 [shape = 'u32[]', space=smem, size = 0x4, offset = 0x4, fixed_abs, tag = 'smem constant byte address 0x4 - core index']
  #allocation1 [shape = 'u32[144,128]{1,0:T(1,128)}', space=vmem, size = 0x12000, scoped, tag = 'internal scratch']
  %s0 = inlined_call_operand.vmem [shape: bf16[128,128], index: 0, kind: input, shape index: {}]
  %s1 = inlined_call_operand.vmem [shape: bf16[128,128], index: 1, kind: input, shape index: {}]
  %s2 = inlined_call_operand.vmem [shape: f32[1,128], index: 2, kind: input, shape index: {}]
  %s3 = inlined_call_operand.vmem [shape: f32[128,128], index: 3, kind: output, shape index: {}]
  %s4 = sld [smem:[#allocation0]]
  $region45: #{vae_forward.9} parent=0
    _
  %s6 = ssub.s32 1, %s4
  %s7 = scalar_select 0, %s6, %s4
  loop: start=0, step=1, limit=4
  $region2: #{vae_forward.9} parent=0 // loop_pre_header
    _
  $region3: #{vae_forward.9} parent=0 // loop_header
    %s9 = sphi 0, %s13
    %p10 = scmp.ge.s32.totalorder %s9, 4
    %s16 = sphi 0, %s28
    %s17 = sphi 0, %s24
    %s18 = sphi 0, %s16
    %s19 = sphi 0, %s17
    %s20 = sphi 0, %s18
    %s21 = sphi 0, %s19
    %s31 = sphi 0, %s33
    %s34 = sphi 0, %s31
    %s35 = sphi 0, %s34
    %s51 = sphi 0, %s35
    %s57 = sphi 0, %s59
    %s60 = sphi 0, %s57
    %s61 = sphi 0, %s60
    %s77 = sphi 0, %s61
    %s83 = sphi 0, %s85
    %s86 = sphi 0, %s83
    %s87 = sphi 0, %s86
    %s103 = sphi 0, %s87
    %s111 = sphi 0, %s113
    %s114 = sphi 0, %s111
    %s115 = sphi 0, %s114
    %s131 = sphi 0, %s115
  $region4: #{vae_forward.9} parent=0 // loop_header_branch
    %12 = sbr.rel (%p10) target = $region8
  $region5: #{vae_forward.9} parent=0 // loop_body
    %s14 = ssub.s32 %s9, 1
    %s15 = ssub.s32 %s9, 2
    %s22 = sadd.s32 1, %s17
    %p23 = scmp.ge.s32.totalorder %s22, 1
    %s24 = scalar_select %p23, 0, %s22
    %s25 = sadd.s32 1, %s16
    %s26 = scalar_select %p23, %s25, %s16
    %p27 = scmp.ge.s32.totalorder %s26, 2
    %s28 = scalar_select %p27, 0, %s26
    %s29 = ssub.s32 %s16, %s28
    %p30 = scmp.eq.s32.totalorder %s29, 0
    %s32 = sadd.s32 %s31, 1
    %s33 = scalar_select %p30, %s31, %s32
    %p36 = pneg %p30
    %p37 = scmp.eq.s32.totalorder %s9, 1
    %p38 = por %p36, %p37
    %p39 = scmp.ne.s32.totalorder %s31, %s34
    %p40 = scmp.eq.s32.totalorder %s9, 0
    %p41 = por %p39, %p40
    %p42 = scmp.ne.s32.totalorder %s31, %s34
    %p43 = scmp.eq.s32.totalorder %s14, 1
    %p44 = por %p42, %p43
    %p45 = scmp.ne.s32.totalorder %s34, %s35
    %p46 = scmp.eq.s32.totalorder %s14, 0
    %p47 = por %p45, %p46
    %p48 = scmp.ne.s32.totalorder %s34, %s35
    %p49 = scmp.eq.s32.totalorder %s15, 1
    %p50 = por %p48, %p49
    %p52 = scmp.ne.s32.totalorder %s35, %s51
    %p53 = scmp.eq.s32.totalorder %s15, 0
    %p54 = por %p52, %p53
    %s55 = ssub.s32 %s17, %s24
    %p56 = scmp.eq.s32.totalorder %s55, 0
    %s58 = sadd.s32 %s57, 1
    %s59 = scalar_select %p56, %s57, %s58
    %p62 = pneg %p56
    %p63 = scmp.eq.s32.totalorder %s9, 1
    %p64 = por %p62, %p63
    %p65 = scmp.ne.s32.totalorder %s57, %s60
    %p66 = scmp.eq.s32.totalorder %s9, 0
    %p67 = por %p65, %p66
    %p68 = scmp.ne.s32.totalorder %s57, %s60
    %p69 = scmp.eq.s32.totalorder %s14, 1
    %p70 = por %p68, %p69
    %p71 = scmp.ne.s32.totalorder %s60, %s61
    %p72 = scmp.eq.s32.totalorder %s14, 0
    %p73 = por %p71, %p72
    %p74 = scmp.ne.s32.totalorder %s60, %s61
    %p75 = scmp.eq.s32.totalorder %s15, 1
    %p76 = por %p74, %p75
    %p78 = scmp.ne.s32.totalorder %s61, %s77
    %p79 = scmp.eq.s32.totalorder %s15, 0
    %p80 = por %p78, %p79
    %s81 = ssub.s32 %s17, %s24
    %p82 = scmp.eq.s32.totalorder %s81, 0
    %s84 = sadd.s32 %s83, 1
    %s85 = scalar_select %p82, %s83, %s84
    %p88 = pneg %p82
    %p89 = scmp.eq.s32.totalorder %s9, 1
    %p90 = por %p88, %p89
    %p91 = scmp.ne.s32.totalorder %s83, %s86
    %p92 = scmp.eq.s32.totalorder %s9, 0
    %p93 = por %p91, %p92
    %p94 = scmp.ne.s32.totalorder %s83, %s86
    %p95 = scmp.eq.s32.totalorder %s14, 1
    %p96 = por %p94, %p95
    %p97 = scmp.ne.s32.totalorder %s86, %s87
    %p98 = scmp.eq.s32.totalorder %s14, 0
    %p99 = por %p97, %p98
    %p100 = scmp.ne.s32.totalorder %s86, %s87
    %p101 = scmp.eq.s32.totalorder %s15, 1
    %p102 = por %p100, %p101
    %p104 = scmp.ne.s32.totalorder %s87, %s103
    %p105 = scmp.eq.s32.totalorder %s15, 0
    %p106 = por %p104, %p105
    %s107 = ssub.s32 %s16, %s28
    %s108 = ssub.s32 %s17, %s24
    %s109 = sor.u32 %s107, %s108
    %p110 = scmp.eq.s32.totalorder %s109, 0
    %s112 = sadd.s32 %s111, 1
    %s113 = scalar_select %p110, %s111, %s112
    %p116 = pneg %p110
    %p117 = scmp.eq.s32.totalorder %s9, 1
    %p118 = por %p116, %p117
    %p119 = scmp.ne.s32.totalorder %s111, %s114
    %p120 = scmp.eq.s32.totalorder %s9, 0
    %p121 = por %p119, %p120
    %p122 = scmp.ne.s32.totalorder %s111, %s114
    %p123 = scmp.eq.s32.totalorder %s14, 1
    %p124 = por %p122, %p123
    %p125 = scmp.ne.s32.totalorder %s114, %s115
    %p126 = scmp.eq.s32.totalorder %s14, 0
    %p127 = por %p125, %p126
    %p128 = scmp.ne.s32.totalorder %s114, %s115
    %p129 = scmp.eq.s32.totalorder %s15, 1
    %p130 = por %p128, %p129
    %p132 = scmp.ne.s32.totalorder %s115, %s131
    %p133 = scmp.eq.s32.totalorder %s15, 0
    %p134 = por %p132, %p133
    %p135 = scmp.le.s32.totalorder 1, %s9
    %p136 = scmp.lt.s32.totalorder %s9, 3
    %p137 = pnand %p135, %p136
    %p138 = pneg %p137
    // Predicated region
    $region9: #{vae_forward.9} parent=5 // pred_check
      _
    $region10: #{vae_forward.9} parent=5 // pred_check_branch
      %140 = sbr.rel (%p137) target = $region12
    $region11: #{vae_forward.9} parent=5 // pred_region
      %s141 = ssub.s32 %s9, 1
      // Predicated region
      $region13: #{vae_forward.9} parent=11 // pred_check
        %p142 = pneg %p73
      $region14: #{vae_forward.9} parent=11 // pred_check_branch
        %144 = sbr.rel (%p142) target = $region16
      $region15: #{vae_forward.9} parent=11 // pred_region
        %p145 = scmp.lt.s32.totalorder %s19, 0
        %s146 = scalar_select %p145, %s19, 0
        %s147 = smul.addr %s146, 4
        %s148 = scalar_lea.vmem %s1, %s147
      $region16: #{vae_forward.9} parent=11 // pred_fallthru
        _
      // Predicated region
      $region17: #{vae_forward.9} parent=11 // pred_check
        %p149 = pneg %p99
      $region18: #{vae_forward.9} parent=11 // pred_check_branch
        %151 = sbr.rel (%p149) target = $region20
      $region19: #{vae_forward.9} parent=11 // pred_region
        %p152 = scmp.lt.s32.totalorder %s19, 0
        %s153 = scalar_select %p152, %s19, 0
        %s154 = scalar_lea.vmem %s2, %s153
      $region20: #{vae_forward.9} parent=11 // pred_fallthru
        _
    $region12: #{vae_forward.9} parent=5 // pred_fallthru
      _
    %p155 = scmp.lt.s32.totalorder %s9, 2
    // Predicated region
    $region21: #{vae_forward.9} parent=5 // pred_check
      %p156 = pneg %p155
    $region22: #{vae_forward.9} parent=5 // pred_check_branch
      %158 = sbr.rel (%p156) target = $region24
    $region23: #{vae_forward.9} parent=5 // pred_region
      // Predicated region
      $region25: #{vae_forward.9} parent=23 // pred_check
        %p159 = pneg %p41
      $region26: #{vae_forward.9} parent=23 // pred_check_branch
        %161 = sbr.rel (%p159) target = $region28
      $region27: #{vae_forward.9} parent=23 // pred_region
        %s162 = smul.u32 8, %s16
        %p163 = scmp.lt.s32.totalorder %s162, 15
        %s164 = scalar_select %p163, %s162, 15
        %s165 = smul.addr %s164, 4
        %s166 = scalar_lea.vmem %s0, %s165
        %s167 = smul.u32 8, %s16
      $region28: #{vae_forward.9} parent=23 // pred_fallthru
        _
    $region24: #{vae_forward.9} parent=5 // pred_fallthru
      _
    %p168 = scmp.le.s32.totalorder 1, %s9
    %p169 = scmp.lt.s32.totalorder %s9, 3
    %p170 = pnand %p168, %p169
    %p171 = pneg %p170
    // Predicated region
    $region29: #{vae_forward.9} parent=5 // pred_check
      _
    $region30: #{vae_forward.9} parent=5 // pred_check_branch
      %173 = sbr.rel (%p170) target = $region32
    $region31: #{vae_forward.9} parent=5 // pred_region
      %s174 = ssub.s32 %s9, 1
      %s175 = smul.u32 8, %s18
      %p176 = scmp.lt.s32.totalorder %s175, 15
      %s177 = scalar_select %p176, %s175, 15
      %s178 = smul.addr %s177, 4
      %s179 = scalar_lea.vmem %s0, %s178
      %p180 = pneg %p47
      %p181 = pneg %p44
      %p182 = scmp.lt.s32.totalorder %s19, 0
      %s183 = scalar_select %p182, %s19, 0
      %s184 = smul.addr %s183, 4
      %s185 = scalar_lea.vmem %s1, %s184
      %p186 = pneg %p73
      %p187 = pneg %p70
      %p188 = scmp.lt.s32.totalorder %s19, 0
      %s189 = scalar_select %p188, %s19, 0
      %s190 = scalar_lea.vmem %s2, %s189
      %p191 = pneg %p99
      %p192 = pneg %p96
      %p193 = pneg %p127
      %p194 = pneg %p124
      %s195 = smul.u32 8, %s18
      %p196 = scmp.lt.s32.totalorder %s195, 15
      %s197 = scalar_select %p196, %s195, 15
      %p198 = scmp.lt.s32.totalorder %s19, 0
      %s199 = scalar_select %p198, %s19, 0
      %s200 = sadd.s32 %s199, %s197
      %s201 = smul.addr %s200, 8
      %s202 = scalar_lea.vmem %s3, %s201
      %s203 = smul.u32 8, %s18
      %p204 = scmp.lt.s32.totalorder %s203, 15
      %s205 = scalar_select %p204, %s203, 15
      %s206 = smul.addr %s205, 4
      %s207 = scalar_lea.vmem %s0, %s206
      %s208 = smul.u32 8, %s18
      %p209 = scmp.lt.s32.totalorder %s19, 0
      %s210 = scalar_select %p209, %s19, 0
      %s211 = smul.addr %s210, 4
      %s212 = scalar_lea.vmem %s1, %s211
      %p213 = scmp.lt.s32.totalorder %s19, 0
      %s214 = scalar_select %p213, %s19, 0
      %s215 = scalar_lea.vmem %s2, %s214
      %s216 = smul.u32 8, %s18
      %p217 = scmp.lt.s32.totalorder %s216, 15
      %s218 = scalar_select %p217, %s216, 15
      %p219 = scmp.lt.s32.totalorder %s19, 0
      %s220 = scalar_select %p219, %s19, 0
      %s221 = sadd.s32 %s220, %s218
      %s222 = smul.addr %s221, 8
      %s223 = scalar_lea.vmem %s3, %s222
      %s224 = smul.u32 8, %s18
      %v226 = vld [vmem:[%s207] sm:$0xf]
      %v227 = vld [vmem:[%s207 + $0x4] sm:$0xf]
      %v228 = vld [vmem:[%s207 + $0x8] sm:$0xf]
      %v229 = vld [vmem:[%s207 + $0xc] sm:$0xf]
      %v230 = vld [vmem:[%s207 + $0x10] sm:$0xf]
      %v231 = vld [vmem:[%s207 + $0x14] sm:$0xf]
      %v232 = vld [vmem:[%s207 + $0x18] sm:$0xf]
      %v233 = vld [vmem:[%s207 + $0x1c] sm:$0xf]
      %v234 = vld [vmem:[%s212] sm:$0xf]
      %v235 = vld [vmem:[%s212 + $0x4] sm:$0xf]
      %v236 = vld [vmem:[%s212 + $0x8] sm:$0xf]
      %v237 = vld [vmem:[%s212 + $0xc] sm:$0xf]
      %v238 = vld [vmem:[%s212 + $0x10] sm:$0xf]
      %v239 = vld [vmem:[%s212 + $0x14] sm:$0xf]
      %v240 = vld [vmem:[%s212 + $0x18] sm:$0xf]
      %v241 = vld [vmem:[%s212 + $0x1c] sm:$0xf]
      %v242 = vld [vmem:[%s212 + $0x20] sm:$0xf]
      %v243 = vld [vmem:[%s212 + $0x24] sm:$0xf]
      %v244 = vld [vmem:[%s212 + $0x28] sm:$0xf]
      %v245 = vld [vmem:[%s212 + $0x2c] sm:$0xf]
      %v246 = vld [vmem:[%s212 + $0x30] sm:$0xf]
      %v247 = vld [vmem:[%s212 + $0x34] sm:$0xf]
      %v248 = vld [vmem:[%s212 + $0x38] sm:$0xf]
      %v249 = vld [vmem:[%s212 + $0x3c] sm:$0xf]
      %v250 = vld [vmem:[%s215] sm:$0x1]
      %v252 = vlaneseq
      %v253 = vshrl.u32 %v252, 7
      %v254 = vsub.s32 0, %v253
      %v255 = vrot.slane %v250, %v254
      %v265 = vunpack.c.l.b16 %v226
      %v266 = vunpack.c.l.b16 %v227
      %v267 = vunpack.c.l.b16 %v228
      %v268 = vunpack.c.l.b16 %v229
      %v269 = vunpack.c.l.b16 %v230
      %v270 = vunpack.c.l.b16 %v231
      %v271 = vunpack.c.l.b16 %v232
      %v272 = vunpack.c.l.b16 %v233
      %v273 = vpack.c.b16 %v266, %v265
      %v274 = vpack.c.b16 %v268, %v267
      %v275 = vpack.c.b16 %v270, %v269
      %v276 = vpack.c.b16 %v272, %v271
      %v297 = vunpack.c.l.b16 %v234
      %v298 = vunpack.c.l.b16 %v235
      %v299 = vunpack.c.l.b16 %v236
      %v300 = vunpack.c.l.b16 %v237
      %v301 = vunpack.c.l.b16 %v238
      %v302 = vunpack.c.l.b16 %v239
      %v303 = vunpack.c.l.b16 %v240
      %v304 = vunpack.c.l.b16 %v241
      %v305 = vunpack.c.l.b16 %v242
      %v306 = vunpack.c.l.b16 %v243
      %v307 = vunpack.c.l.b16 %v244
      %v308 = vunpack.c.l.b16 %v245
      %v309 = vunpack.c.l.b16 %v246
      %v310 = vunpack.c.l.b16 %v247
      %v311 = vunpack.c.l.b16 %v248
      %v312 = vunpack.c.l.b16 %v249
      %v313 = vpack.c.b16 %v298, %v297
      %v314 = vpack.c.b16 %v300, %v299
      %v315 = vpack.c.b16 %v302, %v301
      %v316 = vpack.c.b16 %v304, %v303
      %v317 = vpack.c.b16 %v306, %v305
      %v318 = vpack.c.b16 %v308, %v307
      %v319 = vpack.c.b16 %v310, %v309
      %v320 = vpack.c.b16 %v312, %v311
      %329 = vmatprep.subr.bf16.mxu0 0
      %330 = vmatpush1.bf16.msra.mxu0 %v313
      %331 = vmatprep.subr.bf16.mxu0 0
      %332 = vmatpush1.bf16.msra.mxu0 %v314
      %333 = vmatprep.subr.bf16.mxu0 0
      %334 = vmatpush1.bf16.msra.mxu0 %v315
      %335 = vmatprep.subr.bf16.mxu0 0
      %336 = vmatpush1.bf16.msra.mxu0 %v316
      %337 = vmatprep.subr.bf16.mxu0 0
      %338 = vmatpush1.bf16.msra.mxu0 %v317
      %339 = vmatprep.subr.bf16.mxu0 0
      %340 = vmatpush1.bf16.msra.mxu0 %v318
      %341 = vmatprep.subr.bf16.mxu0 0
      %342 = vmatpush1.bf16.msra.mxu0 %v319
      %343 = vmatprep.subr.bf16.mxu0 0
      %344 = vmatpush1.bf16.msra.mxu0 %v320
      %345 = vmatprep.subr.bf16.mxu0 0
      %346 = vmatpush1.bf16.msra.mxu0 0
      %347 = vmatprep.subr.bf16.mxu0 0
      %348 = vmatpush1.bf16.msra.mxu0 0
      %349 = vmatprep.subr.bf16.mxu0 0
      %350 = vmatpush1.bf16.msra.mxu0 0
      %351 = vmatprep.subr.bf16.mxu0 0
      %352 = vmatpush1.bf16.msra.mxu0 0
      %353 = vmatprep.subr.bf16.mxu0 0
      %354 = vmatpush1.bf16.msra.mxu0 0
      %355 = vmatprep.subr.bf16.mxu0 0
      %356 = vmatpush1.bf16.msra.mxu0 0
      %357 = vmatprep.subr.bf16.mxu0 0
      %358 = vmatpush1.bf16.msra.mxu0 0
      %359 = vmatprep.subr.bf16.mxu0 0
      %360 = vmatpush1.bf16.msra.mxu0 0
      %361 = vmatprep.mubr.bf16.mxu0 0
      %362 = vmatmul.mubr.bf16.gmra.mrb[0].mxu0 %v273
      %v363 = vpop.f32.mrb[0].mxu0
      %v364 = vadd.f32 %v255, %v363
      %v365 = vpop.f32.mrb[0].mxu0
      %v366 = vpop.f32.mrb[0].mxu0
      %v367 = vadd.f32 %v255, %v366
      %v368 = vpop.f32.mrb[0].mxu0
      %369 = vmatprep.mubr.bf16.mxu0 0
      %370 = vmatmul.mubr.bf16.gmra.mrb[0].mxu0 %v274
      %v371 = vpop.f32.mrb[0].mxu0
      %v372 = vadd.f32 %v255, %v371
      %v373 = vpop.f32.mrb[0].mxu0
      %v374 = vpop.f32.mrb[0].mxu0
      %v375 = vadd.f32 %v255, %v374
      %v376 = vpop.f32.mrb[0].mxu0
      %377 = vmatprep.mubr.bf16.mxu0 0
      %378 = vmatmul.mubr.bf16.gmra.mrb[0].mxu0 %v275
      %v379 = vpop.f32.mrb[0].mxu0
      %v380 = vadd.f32 %v255, %v379
      %v381 = vpop.f32.mrb[0].mxu0
      %v382 = vpop.f32.mrb[0].mxu0
      %v383 = vadd.f32 %v255, %v382
      %v384 = vpop.f32.mrb[0].mxu0
      %385 = vmatprep.mubr.bf16.mxu0 0
      %386 = vmatmul.mubr.bf16.gmra.mrb[0].mxu0 %v276
      %v387 = vpop.f32.mrb[0].mxu0
      %v388 = vadd.f32 %v255, %v387
      %v389 = vpop.f32.mrb[0].mxu0
      %v390 = vpop.f32.mrb[0].mxu0
      %v391 = vadd.f32 %v255, %v390
      %v392 = vpop.f32.mrb[0].mxu0
      %393 = vdwg.mxu0
      %v394 = vtanh.pop %v364
      %v395 = vtanh.pop %v367
      %v396 = vtanh.pop %v372
      %v397 = vtanh.pop %v375
      %v398 = vtanh.pop %v380
      %v399 = vtanh.pop %v383
      %v400 = vtanh.pop %v388
      %v401 = vtanh.pop %v391
      %402 = vst [vmem:[%s223] sm:$0xff] %v394
      %403 = vst [vmem:[%s223 + $0x8] sm:$0xff] %v395
      %404 = vst [vmem:[%s223 + $0x10] sm:$0xff] %v396
      %405 = vst [vmem:[%s223 + $0x18] sm:$0xff] %v397
      %406 = vst [vmem:[%s223 + $0x20] sm:$0xff] %v398
      %407 = vst [vmem:[%s223 + $0x28] sm:$0xff] %v399
      %408 = vst [vmem:[%s223 + $0x30] sm:$0xff] %v400
      %409 = vst [vmem:[%s223 + $0x38] sm:$0xff] %v401
      %s410 = smul.u32 8, %s18
      %p411 = scmp.lt.s32.totalorder %s410, 15
      %s412 = scalar_select %p411, %s410, 15
      %p413 = scmp.lt.s32.totalorder %s19, 0
      %s414 = scalar_select %p413, %s19, 0
      %s415 = sadd.s32 %s414, %s412
      %s416 = smul.addr %s415, 8
      %s417 = scalar_lea.vmem %s3, %s416
      // Predicated region
      $region33: #{vae_forward.9} parent=31 // pred_check
        %p418 = pneg %p124
      $region34: #{vae_forward.9} parent=31 // pred_check_branch
        %420 = sbr.rel (%p418) target = $region36
      $region35: #{vae_forward.9} parent=31 // pred_region
        %s421 = smul.u32 8, %s18
      $region36: #{vae_forward.9} parent=31 // pred_fallthru
        _
    $region32: #{vae_forward.9} parent=5 // pred_fallthru
      _
    %p422 = scmp.le.s32.totalorder 2, %s9
    // Predicated region
    $region37: #{vae_forward.9} parent=5 // pred_check
      %p423 = pneg %p422
    $region38: #{vae_forward.9} parent=5 // pred_check_branch
      %425 = sbr.rel (%p423) target = $region40
    $region39: #{vae_forward.9} parent=5 // pred_region
      %s426 = ssub.s32 %s9, 2
      // Predicated region
      $region41: #{vae_forward.9} parent=39 // pred_check
        %p427 = pneg %p130
      $region42: #{vae_forward.9} parent=39 // pred_check_branch
        %429 = sbr.rel (%p427) target = $region44
      $region43: #{vae_forward.9} parent=39 // pred_region
        %s430 = smul.u32 8, %s20
        %p431 = scmp.lt.s32.totalorder %s430, 15
        %s432 = scalar_select %p431, %s430, 15
        %p433 = scmp.lt.s32.totalorder %s21, 0
        %s434 = scalar_select %p433, %s21, 0
        %s435 = sadd.s32 %s434, %s432
        %s436 = smul.addr %s435, 8
        %s437 = scalar_lea.vmem %s3, %s436
      $region44: #{vae_forward.9} parent=39 // pred_fallthru
        _
    $region40: #{vae_forward.9} parent=5 // pred_fallthru
      _
  $region6: #{vae_forward.9} parent=0 // loop_footer
    %s13 = sadd.s32 1, %s9
  $region7: #{vae_forward.9} parent=0 // loop_footer_branch
    %8 = sbr.rel target = $region3
  $region8: #{vae_forward.9} parent=0 // loop_exit
    _

</llo_original>
